<compile_context>
chip_gen: v6e
topology: v6e:2x2x1
jax: 0.10.0
libtpu: 0.0.40
codegen_flags: <defaults>
</compile_context>

<pallas_src>
import numpy as np
import jax
import jax.numpy as jnp
from jax.experimental import pallas as pl
from jax.experimental.pallas import tpu as pltpu


def _round_up(x, m):
    return ((x + m - 1) // m) * m


def _largest_divisor_leq(n, cap):
    for k in range(min(n, cap), 0, -1):
        if n % k == 0:
            return k
    return 1


def _choose_lane_split(L, max_tile=2048):
    """Split lane dim into >=2 tiles (v7x megacore) when possible; tile width multiple of 128."""
    n = max(2, -(-L // max_tile))
    while n <= L // 128:
        if L % n == 0 and (L // n) % 128 == 0:
            return n, L // n
        n += 1
    return 1, L


def ddpm_coeffs(beta_1, beta_T, T):
    """Exactly mirrors the buffers registered in SamplerDDPM.__init__ (float64)."""
    betas = np.linspace(beta_1, beta_T, T, dtype=np.float64)
    alphas = 1.0 - betas
    alphas_bar = np.cumprod(alphas)
    alphas_bar_prev = np.concatenate([[1.0], alphas_bar[:-1]])
    coeff1 = np.sqrt(1.0 / alphas)
    coeff2 = coeff1 * (1.0 - alphas) / np.sqrt(1.0 - alphas_bar)
    posterior_var = betas * (1.0 - alphas_bar_prev) / (1.0 - alphas_bar)
    var = np.concatenate([posterior_var[1:2], betas[1:]])  # p_mean_variance's `var`
    return (coeff1.astype(np.float32),
            coeff2.astype(np.float32),
            np.sqrt(var).astype(np.float32))


def _build_sampler(C_aug, L, lane_tile, n_lane, T, K):
    """grid = (lane tiles [parallel], time blocks [arbitrary]); grid step i covers K steps."""
    n_tb = T // K

    def kernel(xT_ref, w_ref, sv_ref, noise_ref, x_ref):
        tb = pl.program_id(1)
        last_tb = pl.num_programs(1) - 1

        # Initialize the carried state x_t <- x_T at the first time block of this lane tile.
        @pl.when(tb == 0)
        def _init():
            x_ref[...] = xT_ref[...]

        x = x_ref[...]                                     # (C_aug, lane_tile) f32, stays in vregs
        base = tb * K
        # Static K-unrolled recurrence: one tiny augmented MXU matmul (bias folded into the
        # indicator columns of W_t) + one noise FMA per step.  sv for time_step 0 is 0, so the
        # last step naturally reduces to the posterior mean.
        # NOTE: for production C (64+) jnp.dot stays MXU-bound-friendly; for very small C a
        # pure-VPU FMA formulation may beat the MXU push+drain latency on this serial path.
        for k in range(K):
            i = base + k
            y = jnp.dot(w_ref[i], x, preferred_element_type=jnp.float32)
            x = y + sv_ref[i] * noise_ref[k].astype(jnp.float32)

        # Last time block: x_0 = clip(mean, -1, 1); otherwise carry x_t in the output block.
        @pl.when(tb == last_tb)
        def _final():
            x_ref[...] = jnp.clip(x, -1.0, 1.0)

        @pl.when(tb < last_tb)
        def _carry():
            x_ref[...] = x

    grid_spec = pltpu.PrefetchScalarGridSpec(
        num_scalar_prefetch=0,
        grid=(n_lane, n_tb),
        in_specs=[
            pl.BlockSpec((C_aug, lane_tile), lambda l, tb: (0, l)),          # x_T lane tile
            pl.BlockSpec((T, C_aug, C_aug), lambda l, tb: (0, 0, 0)),        # all W_t, VMEM-resident
            pl.BlockSpec(memory_space=pltpu.MemorySpace.SMEM),               # sqrt(var) (reversed)
            pl.BlockSpec((K, C_aug, lane_tile), lambda l, tb: (tb, 0, l)),   # bf16 noise, K steps/blk
        ],
        out_specs=pl.BlockSpec((C_aug, lane_tile), lambda l, tb: (0, l)),    # carried x_t / x_0
    )

    # Tight VMEM budget derived from the actual resident footprint (double-buffered noise,
    # W table, x_T and output blocks), with 2x margin and an 8 MiB floor.
    footprint = (2 * T * C_aug * C_aug * 4            # W_t table (worst-case double buffer)
                 + 2 * K * C_aug * lane_tile * 2      # bf16 noise, double buffered
                 + 4 * C_aug * lane_tile * 4)         # x_T block + output block
    vmem_limit = int(max(8 << 20, 2 * footprint))

    return pl.pallas_call(
        kernel,
        grid_spec=grid_spec,
        out_shape=jax.ShapeDtypeStruct((C_aug, L), jnp.float32),
        compiler_params=pltpu.CompilerParams(
            dimension_semantics=("parallel", "arbitrary"),
            vmem_limit_bytes=vmem_limit,
        ),
    )


def sample_ddpm(x_T, labels, Wmix, temb, label_emb, noise, beta_1, beta_T, T, w):
    """Host glue: coefficient/CFG folding and layout prep in numpy/JAX, loop+math in Pallas."""
    B, C, H, W_ = x_T.shape
    HW = H * W_
    HW_pad = _round_up(HW, 128)
    C_aug = _round_up(C + B, 8)          # C channels + B per-batch bias indicator rows
    L = B * HW_pad                       # batch folded into the lane dimension
    n_lane, lane_tile = _choose_lane_split(L)
    K = _largest_divisor_leq(T, 16)      # time-block size (K steps per grid point)

    c1, c2, sv = ddpm_coeffs(beta_1, beta_T, T)

    # ---- algebraic fold of the synthetic eps-model + CFG + posterior mean ----
    Wmix_np = np.asarray(Wmix, dtype=np.float32)
    eyeC = np.eye(C, dtype=np.float32)
    Wt = c1[:, None, None] * eyeC[None] - c2[:, None, None] * Wmix_np[None]       # (T, C, C)

    le = np.asarray(label_emb, dtype=np.float32)
    emb_cond = le[np.asarray(labels)]                                             # (B, C)
    emb_unc = le[0]                                                               # (C,)  label 0 = null class
    e = (np.asarray(temb, dtype=np.float32)[:, None, :]
         + (1.0 + w) * emb_cond[None, :, :]
         - w * emb_unc[None, None, :])                                            # (T, B, C)
    bias = -c2[:, None, None] * e                                                 # (T, B, C)

    # Augmented per-step matrix: [ W_t  bias_t[b] columns ; 0  I_B ] (padded to C_aug).
    W_aug = np.zeros((T, C_aug, C_aug), np.float32)
    W_aug[:, :C, :C] = Wt
    for b in range(B):
        W_aug[:, :C, C + b] = bias[:, b, :]
        W_aug[:, C + b, C + b] = 1.0

    # Reverse time so grid-internal index i corresponds to time_step = T - 1 - i.
    W_aug_r = np.ascontiguousarray(W_aug[::-1])
    sv_r = np.ascontiguousarray(sv[::-1]).astype(np.float32)
    sv_r[-1] = 0.0                        # time_step == 0 adds no noise

    # Augmented initial state slab (C_aug, B*HW_pad): channels + per-batch ones rows.
    xT_np = np.asarray(x_T, np.float32).reshape(B, C, HW)
    x_aug = np.zeros((C_aug, L), np.float32)
    for b in range(B):
        x_aug[:C, b * HW_pad:b * HW_pad + HW] = xT_np[b]
        x_aug[C + b, b * HW_pad:(b + 1) * HW_pad] = 1.0

    # TODO(synk): torch.randn_like inside the loop has no in-kernel equivalent matching torch
    # RNG; noise is pre-sampled on host and streamed per step (bf16 to halve HBM traffic).
    # Pallas' in-kernel PRNG (pltpu.prng_seed / stateful_normal) could delete this stream
    # entirely if bit-parity with the host noise is not required.
    noise_r = jnp.asarray(noise).astype(jnp.bfloat16)[::-1].reshape(T, B, C, HW)
    noise_r = jnp.pad(noise_r, ((0, 0), (0, 0), (0, C_aug - C), (0, HW_pad - HW)))
    noise_r = jnp.transpose(noise_r, (0, 2, 1, 3)).reshape(T, C_aug, L)           # (T, C_aug, L)

    call = _build_sampler(C_aug, L, lane_tile, n_lane, T, K)
    out = call(jnp.asarray(x_aug), jnp.asarray(W_aug_r), jnp.asarray(sv_r), noise_r)

    res = out[:C].reshape(C, B, HW_pad)[:, :, :HW]
    return jnp.transpose(res, (1, 0, 2)).reshape(B, C, H, W_)


def reference_sample(x_T, labels, Wmix, temb, label_emb, noise, beta_1, beta_T, T, w):
    """Pure-numpy, UNFUSED replica of SamplerDDPM.forward with the synthetic model."""
    c1, c2, sv = ddpm_coeffs(beta_1, beta_T, T)
    B, C, H, W_ = x_T.shape
    x = np.asarray(x_T, dtype=np.float32).reshape(B, C, H * W_)
    Wm = np.asarray(Wmix, dtype=np.float32)
    te = np.asarray(temb, dtype=np.float32)
    le = np.asarray(label_emb, dtype=np.float32)
    no = np.asarray(noise, dtype=np.float32).reshape(T, B, C, H * W_)
    lab = np.asarray(labels)
    for time_step in reversed(range(T)):
        eps_base = np.einsum('ij,bjk->bik', Wm, x)
        eps_c = eps_base + te[time_step][None, :, None] + le[lab][:, :, None]
        eps_u = eps_base + te[time_step][None, :, None] + le[0][None, :, None]
        eps = (1.0 + w) * eps_c - w * eps_u
        mean = c1[time_step] * x - c2[time_step] * eps
        n = no[time_step] if time_step > 0 else 0.0
        x = mean + sv[time_step] * n
    return np.clip(x, -1.0, 1.0).reshape(B, C, H, W_)


if __name__ == "__main__":
    B, C, H, W_ = 2, 8, 16, 16
    T = 8
    w = 0.5
    beta_1, beta_T = 1e-4, 0.02
    num_classes = 4

    key = jax.random.PRNGKey(0)
    k1, k2, k3, k4, k5, k6 = jax.random.split(key, 6)
    x_T = jax.random.normal(k1, (B, C, H, W_), jnp.float32)
    labels = jax.random.randint(k2, (B,), 1, num_classes)            # > 0: guided
    Wmix = jax.random.normal(k3, (C, C), jnp.float32) * 0.3          # synthetic model params
    temb = jax.random.normal(k4, (T, C), jnp.float32) * 0.1
    label_emb = jax.random.normal(k5, (num_classes, C), jnp.float32) * 0.1
    # Pre-sampled Gaussian noise; quantize the sample to bf16 once so the kernel's bf16
    # stream and the f32 reference consume the exact same noise values.
    noise = jax.random.normal(k6, (T, B, C, H, W_), jnp.float32).astype(jnp.bfloat16)

    out = sample_ddpm(x_T, labels, Wmix, temb, label_emb, noise,
                      beta_1, beta_T, T, w)
    out = jax.block_until_ready(out)

    ref = reference_sample(np.asarray(x_T), np.asarray(labels), np.asarray(Wmix),
                           np.asarray(temb), np.asarray(label_emb),
                           np.asarray(noise.astype(jnp.float32)),
                           beta_1, beta_T, T, w)

    out_np = np.asarray(out)
    assert out_np.shape == (B, C, H, W_)
    assert not np.any(np.isnan(out_np)), "nan in tensor."
    assert np.allclose(out_np, ref, atol=2e-3, rtol=2e-3), \
        f"max abs err {np.max(np.abs(out_np - ref))}"
    print("KERNEL_OK")
</pallas_src>

<mosaic_0001>
module attributes {stable_mosaic.version = 11 : i64} {
  func.func @kernel(%arg0: i32, %arg1: i32, %arg2: memref<16x256xf32, #tpu.memory_space<vmem>>, %arg3: memref<8x16x16xf32, #tpu.memory_space<vmem>>, %arg4: memref<8xf32, #tpu.memory_space<smem>>, %arg5: memref<8x16x256xbf16, #tpu.memory_space<vmem>>, %arg6: memref<16x256xf32, #tpu.memory_space<vmem>>) attributes {dimension_semantics = [#tpu.dimension_semantics<parallel>, #tpu.dimension_semantics<arbitrary>], iteration_bounds = array<i64: 2, 1>, scalar_prefetch = 0 : i64, scratch_operands = 0 : i64, tpu.core_type = #tpu.core_type<tc>, window_params = [{transform_indices = @transform_0, window_bounds = array<i64: 16, 256>}, {pipeline_mode = #tpu.pipeline_mode<synchronous>, transform_indices = @transform_1, window_bounds = array<i64: 8, 16, 16>}, {transform_indices = @transform_2, window_bounds = array<i64: 8>}, {transform_indices = @transform_3, window_bounds = array<i64: 8, 16, 256>}, {transform_indices = @transform_4, window_bounds = array<i64: 16, 256>}]} {
    %c0_i32 = arith.constant 0 : i32
    %0 = arith.cmpi eq, %arg1, %c0_i32 : i32
    %1 = arith.extui %0 : i1 to i32
    %c0_i32_0 = arith.constant 0 : i32
    %2 = arith.cmpi ne, %1, %c0_i32_0 : i32
    scf.if %2 {
      %c0_47 = arith.constant 0 : index
      %c0_48 = arith.constant 0 : index
      %115 = vector.load %arg2[%c0_47, %c0_48] : memref<16x256xf32, #tpu.memory_space<vmem>>, vector<16x256xf32>
      %c0_49 = arith.constant 0 : index
      %c0_50 = arith.constant 0 : index
      %116 = vector.load %arg6[%c0_49, %c0_50] : memref<16x256xf32, #tpu.memory_space<vmem>>, vector<16x256xf32>
      tpu.vector_store %arg6[%c0_49, %c0_50], %115 {strides = array<i32>} : memref<16x256xf32, #tpu.memory_space<vmem>>, vector<16x256xf32>,
    } else {
    }
    %c0 = arith.constant 0 : index
    %c0_1 = arith.constant 0 : index
    %3 = vector.load %arg6[%c0, %c0_1] : memref<16x256xf32, #tpu.memory_space<vmem>>, vector<16x256xf32>
    %c8_i32 = arith.constant 8 : i32
    %4 = arith.muli %arg1, %c8_i32 : i32
    %c0_i32_2 = arith.constant 0 : i32
    %5 = arith.addi %4, %c0_i32_2 : i32
    %6 = arith.index_cast %5 : i32 to index
    %c0_3 = arith.constant 0 : index
    %c0_4 = arith.constant 0 : index
    %7 = vector.load %arg3[%6, %c0_3, %c0_4] : memref<8x16x16xf32, #tpu.memory_space<vmem>>, vector<1x16x16xf32>
    %8 = vector.shape_cast %7 : vector<1x16x16xf32> to vector<16x16xf32>
    %cst = arith.constant dense<0.000000e+00> : vector<16x256xf32>
    %9 = tpu.matmul %8, %3, %cst {dimension_numbers = #tpu.dot_dimension_numbers<[1], [0], [0], [1], [0, 0, 1, 1], [], []>} : vector<16x16xf32>, vector<16x256xf32>, vector<16x256xf32> -> vector<16x256xf32>
    %10 = arith.index_cast %5 : i32 to index
    %11 = memref.load %arg4[%10] : memref<8xf32, #tpu.memory_space<smem>>
    %c0_5 = arith.constant 0 : index
    %c0_6 = arith.constant 0 : index
    %c0_7 = arith.constant 0 : index
    %12 = vector.load %arg5[%c0_5, %c0_6, %c0_7] : memref<8x16x256xbf16, #tpu.memory_space<vmem>>, vector<1x16x256xbf16>
    %13 = vector.shape_cast %12 : vector<1x16x256xbf16> to vector<16x256xbf16>
    %14 = arith.extf %13 : vector<16x256xbf16> to vector<16x256xf32>
    %15 = vector.broadcast %11 : f32 to vector<16x256xf32>
    %16 = arith.mulf %15, %14 : vector<16x256xf32>
    %17 = arith.addf %9, %16 : vector<16x256xf32>
    %c1_i32 = arith.constant 1 : i32
    %18 = arith.addi %4, %c1_i32 : i32
    %19 = arith.index_cast %18 : i32 to index
    %c0_8 = arith.constant 0 : index
    %c0_9 = arith.constant 0 : index
    %20 = vector.load %arg3[%19, %c0_8, %c0_9] : memref<8x16x16xf32, #tpu.memory_space<vmem>>, vector<1x16x16xf32>
    %21 = vector.shape_cast %20 : vector<1x16x16xf32> to vector<16x16xf32>
    %cst_10 = arith.constant dense<0.000000e+00> : vector<16x256xf32>
    %22 = tpu.matmul %21, %17, %cst_10 {dimension_numbers = #tpu.dot_dimension_numbers<[1], [0], [0], [1], [0, 0, 1, 1], [], []>} : vector<16x16xf32>, vector<16x256xf32>, vector<16x256xf32> -> vector<16x256xf32>
    %23 = arith.index_cast %18 : i32 to index
    %24 = memref.load %arg4[%23] : memref<8xf32, #tpu.memory_space<smem>>
    %c1 = arith.constant 1 : index
    %c0_11 = arith.constant 0 : index
    %c0_12 = arith.constant 0 : index
    %25 = vector.load %arg5[%c1, %c0_11, %c0_12] : memref<8x16x256xbf16, #tpu.memory_space<vmem>>, vector<1x16x256xbf16>
    %26 = vector.shape_cast %25 : vector<1x16x256xbf16> to vector<16x256xbf16>
    %27 = arith.extf %26 : vector<16x256xbf16> to vector<16x256xf32>
    %28 = vector.broadcast %24 : f32 to vector<16x256xf32>
    %29 = arith.mulf %28, %27 : vector<16x256xf32>
    %30 = arith.addf %22, %29 : vector<16x256xf32>
    %c2_i32 = arith.constant 2 : i32
    %31 = arith.addi %4, %c2_i32 : i32
    %32 = arith.index_cast %31 : i32 to index
    %c0_13 = arith.constant 0 : index
    %c0_14 = arith.constant 0 : index
    %33 = vector.load %arg3[%32, %c0_13, %c0_14] : memref<8x16x16xf32, #tpu.memory_space<vmem>>, vector<1x16x16xf32>
    %34 = vector.shape_cast %33 : vector<1x16x16xf32> to vector<16x16xf32>
    %cst_15 = arith.constant dense<0.000000e+00> : vector<16x256xf32>
    %35 = tpu.matmul %34, %30, %cst_15 {dimension_numbers = #tpu.dot_dimension_numbers<[1], [0], [0], [1], [0, 0, 1, 1], [], []>} : vector<16x16xf32>, vector<16x256xf32>, vector<16x256xf32> -> vector<16x256xf32>
    %36 = arith.index_cast %31 : i32 to index
    %37 = memref.load %arg4[%36] : memref<8xf32, #tpu.memory_space<smem>>
    %c2 = arith.constant 2 : index
    %c0_16 = arith.constant 0 : index
    %c0_17 = arith.constant 0 : index
    %38 = vector.load %arg5[%c2, %c0_16, %c0_17] : memref<8x16x256xbf16, #tpu.memory_space<vmem>>, vector<1x16x256xbf16>
    %39 = vector.shape_cast %38 : vector<1x16x256xbf16> to vector<16x256xbf16>
    %40 = arith.extf %39 : vector<16x256xbf16> to vector<16x256xf32>
    %41 = vector.broadcast %37 : f32 to vector<16x256xf32>
    %42 = arith.mulf %41, %40 : vector<16x256xf32>
    %43 = arith.addf %35, %42 : vector<16x256xf32>
    %c3_i32 = arith.constant 3 : i32
    %44 = arith.addi %4, %c3_i32 : i32
    %45 = arith.index_cast %44 : i32 to index
    %c0_18 = arith.constant 0 : index
    %c0_19 = arith.constant 0 : index
    %46 = vector.load %arg3[%45, %c0_18, %c0_19] : memref<8x16x16xf32, #tpu.memory_space<vmem>>, vector<1x16x16xf32>
    %47 = vector.shape_cast %46 : vector<1x16x16xf32> to vector<16x16xf32>
    %cst_20 = arith.constant dense<0.000000e+00> : vector<16x256xf32>
    %48 = tpu.matmul %47, %43, %cst_20 {dimension_numbers = #tpu.dot_dimension_numbers<[1], [0], [0], [1], [0, 0, 1, 1], [], []>} : vector<16x16xf32>, vector<16x256xf32>, vector<16x256xf32> -> vector<16x256xf32>
    %49 = arith.index_cast %44 : i32 to index
    %50 = memref.load %arg4[%49] : memref<8xf32, #tpu.memory_space<smem>>
    %c3 = arith.constant 3 : index
    %c0_21 = arith.constant 0 : index
    %c0_22 = arith.constant 0 : index
    %51 = vector.load %arg5[%c3, %c0_21, %c0_22] : memref<8x16x256xbf16, #tpu.memory_space<vmem>>, vector<1x16x256xbf16>
    %52 = vector.shape_cast %51 : vector<1x16x256xbf16> to vector<16x256xbf16>
    %53 = arith.extf %52 : vector<16x256xbf16> to vector<16x256xf32>
    %54 = vector.broadcast %50 : f32 to vector<16x256xf32>
    %55 = arith.mulf %54, %53 : vector<16x256xf32>
    %56 = arith.addf %48, %55 : vector<16x256xf32>
    %c4_i32 = arith.constant 4 : i32
    %57 = arith.addi %4, %c4_i32 : i32
    %58 = arith.index_cast %57 : i32 to index
    %c0_23 = arith.constant 0 : index
    %c0_24 = arith.constant 0 : index
    %59 = vector.load %arg3[%58, %c0_23, %c0_24] : memref<8x16x16xf32, #tpu.memory_space<vmem>>, vector<1x16x16xf32>
    %60 = vector.shape_cast %59 : vector<1x16x16xf32> to vector<16x16xf32>
    %cst_25 = arith.constant dense<0.000000e+00> : vector<16x256xf32>
    %61 = tpu.matmul %60, %56, %cst_25 {dimension_numbers = #tpu.dot_dimension_numbers<[1], [0], [0], [1], [0, 0, 1, 1], [], []>} : vector<16x16xf32>, vector<16x256xf32>, vector<16x256xf32> -> vector<16x256xf32>
    %62 = arith.index_cast %57 : i32 to index
    %63 = memref.load %arg4[%62] : memref<8xf32, #tpu.memory_space<smem>>
    %c4 = arith.constant 4 : index
    %c0_26 = arith.constant 0 : index
    %c0_27 = arith.constant 0 : index
    %64 = vector.load %arg5[%c4, %c0_26, %c0_27] : memref<8x16x256xbf16, #tpu.memory_space<vmem>>, vector<1x16x256xbf16>
    %65 = vector.shape_cast %64 : vector<1x16x256xbf16> to vector<16x256xbf16>
    %66 = arith.extf %65 : vector<16x256xbf16> to vector<16x256xf32>
    %67 = vector.broadcast %63 : f32 to vector<16x256xf32>
    %68 = arith.mulf %67, %66 : vector<16x256xf32>
    %69 = arith.addf %61, %68 : vector<16x256xf32>
    %c5_i32 = arith.constant 5 : i32
    %70 = arith.addi %4, %c5_i32 : i32
    %71 = arith.index_cast %70 : i32 to index
    %c0_28 = arith.constant 0 : index
    %c0_29 = arith.constant 0 : index
    %72 = vector.load %arg3[%71, %c0_28, %c0_29] : memref<8x16x16xf32, #tpu.memory_space<vmem>>, vector<1x16x16xf32>
    %73 = vector.shape_cast %72 : vector<1x16x16xf32> to vector<16x16xf32>
    %cst_30 = arith.constant dense<0.000000e+00> : vector<16x256xf32>
    %74 = tpu.matmul %73, %69, %cst_30 {dimension_numbers = #tpu.dot_dimension_numbers<[1], [0], [0], [1], [0, 0, 1, 1], [], []>} : vector<16x16xf32>, vector<16x256xf32>, vector<16x256xf32> -> vector<16x256xf32>
    %75 = arith.index_cast %70 : i32 to index
    %76 = memref.load %arg4[%75] : memref<8xf32, #tpu.memory_space<smem>>
    %c5 = arith.constant 5 : index
    %c0_31 = arith.constant 0 : index
    %c0_32 = arith.constant 0 : index
    %77 = vector.load %arg5[%c5, %c0_31, %c0_32] : memref<8x16x256xbf16, #tpu.memory_space<vmem>>, vector<1x16x256xbf16>
    %78 = vector.shape_cast %77 : vector<1x16x256xbf16> to vector<16x256xbf16>
    %79 = arith.extf %78 : vector<16x256xbf16> to vector<16x256xf32>
    %80 = vector.broadcast %76 : f32 to vector<16x256xf32>
    %81 = arith.mulf %80, %79 : vector<16x256xf32>
    %82 = arith.addf %74, %81 : vector<16x256xf32>
    %c6_i32 = arith.constant 6 : i32
    %83 = arith.addi %4, %c6_i32 : i32
    %84 = arith.index_cast %83 : i32 to index
    %c0_33 = arith.constant 0 : index
    %c0_34 = arith.constant 0 : index
    %85 = vector.load %arg3[%84, %c0_33, %c0_34] : memref<8x16x16xf32, #tpu.memory_space<vmem>>, vector<1x16x16xf32>
    %86 = vector.shape_cast %85 : vector<1x16x16xf32> to vector<16x16xf32>
    %cst_35 = arith.constant dense<0.000000e+00> : vector<16x256xf32>
    %87 = tpu.matmul %86, %82, %cst_35 {dimension_numbers = #tpu.dot_dimension_numbers<[1], [0], [0], [1], [0, 0, 1, 1], [], []>} : vector<16x16xf32>, vector<16x256xf32>, vector<16x256xf32> -> vector<16x256xf32>
    %88 = arith.index_cast %83 : i32 to index
    %89 = memref.load %arg4[%88] : memref<8xf32, #tpu.memory_space<smem>>
    %c6 = arith.constant 6 : index
    %c0_36 = arith.constant 0 : index
    %c0_37 = arith.constant 0 : index
    %90 = vector.load %arg5[%c6, %c0_36, %c0_37] : memref<8x16x256xbf16, #tpu.memory_space<vmem>>, vector<1x16x256xbf16>
    %91 = vector.shape_cast %90 : vector<1x16x256xbf16> to vector<16x256xbf16>
    %92 = arith.extf %91 : vector<16x256xbf16> to vector<16x256xf32>
    %93 = vector.broadcast %89 : f32 to vector<16x256xf32>
    %94 = arith.mulf %93, %92 : vector<16x256xf32>
    %95 = arith.addf %87, %94 : vector<16x256xf32>
    %c7_i32 = arith.constant 7 : i32
    %96 = arith.addi %4, %c7_i32 : i32
    %97 = arith.index_cast %96 : i32 to index
    %c0_38 = arith.constant 0 : index
    %c0_39 = arith.constant 0 : index
    %98 = vector.load %arg3[%97, %c0_38, %c0_39] : memref<8x16x16xf32, #tpu.memory_space<vmem>>, vector<1x16x16xf32>
    %99 = vector.shape_cast %98 : vector<1x16x16xf32> to vector<16x16xf32>
    %cst_40 = arith.constant dense<0.000000e+00> : vector<16x256xf32>
    %100 = tpu.matmul %99, %95, %cst_40 {dimension_numbers = #tpu.dot_dimension_numbers<[1], [0], [0], [1], [0, 0, 1, 1], [], []>} : vector<16x16xf32>, vector<16x256xf32>, vector<16x256xf32> -> vector<16x256xf32>
    %101 = arith.index_cast %96 : i32 to index
    %102 = memref.load %arg4[%101] : memref<8xf32, #tpu.memory_space<smem>>
    %c7 = arith.constant 7 : index
    %c0_41 = arith.constant 0 : index
    %c0_42 = arith.constant 0 : index
    %103 = vector.load %arg5[%c7, %c0_41, %c0_42] : memref<8x16x256xbf16, #tpu.memory_space<vmem>>, vector<1x16x256xbf16>
    %104 = vector.shape_cast %103 : vector<1x16x256xbf16> to vector<16x256xbf16>
    %105 = arith.extf %104 : vector<16x256xbf16> to vector<16x256xf32>
    %106 = vector.broadcast %102 : f32 to vector<16x256xf32>
    %107 = arith.mulf %106, %105 : vector<16x256xf32>
    %108 = arith.addf %100, %107 : vector<16x256xf32>
    %c0_i32_43 = arith.constant 0 : i32
    %109 = arith.cmpi eq, %arg1, %c0_i32_43 : i32
    %110 = arith.extui %109 : i1 to i32
    %c0_i32_44 = arith.constant 0 : i32
    %111 = arith.cmpi ne, %110, %c0_i32_44 : i32
    scf.if %111 {
      %cst_47 = arith.constant -1.000000e+00 : f32
      %cst_48 = arith.constant 1.000000e+00 : f32
      %115 = vector.broadcast %cst_47 : f32 to vector<16x256xf32>
      %116 = arith.maximumf %115, %108 : vector<16x256xf32>
      %117 = vector.broadcast %cst_48 : f32 to vector<16x256xf32>
      %118 = arith.minimumf %117, %116 : vector<16x256xf32>
      %c0_49 = arith.constant 0 : index
      %c0_50 = arith.constant 0 : index
      %119 = vector.load %arg6[%c0_49, %c0_50] : memref<16x256xf32, #tpu.memory_space<vmem>>, vector<16x256xf32>
      tpu.vector_store %arg6[%c0_49, %c0_50], %118 {strides = array<i32>} : memref<16x256xf32, #tpu.memory_space<vmem>>, vector<16x256xf32>,
    } else {
    }
    %c0_i32_45 = arith.constant 0 : i32
    %112 = arith.cmpi slt, %arg1, %c0_i32_45 : i32
    %113 = arith.extui %112 : i1 to i32
    %c0_i32_46 = arith.constant 0 : i32
    %114 = arith.cmpi ne, %113, %c0_i32_46 : i32
    scf.if %114 {
      %c0_47 = arith.constant 0 : index
      %c0_48 = arith.constant 0 : index
      %115 = vector.load %arg6[%c0_47, %c0_48] : memref<16x256xf32, #tpu.memory_space<vmem>>, vector<16x256xf32>
      tpu.vector_store %arg6[%c0_47, %c0_48], %108 {strides = array<i32>} : memref<16x256xf32, #tpu.memory_space<vmem>>, vector<16x256xf32>,
    } else {
    }
    return
  }
  func.func @transform_0(%arg0: i32, %arg1: i32) -> (i32, i32) {
    %c0_i32 = arith.constant 0 : i32
    %c0_i32_0 = arith.constant 0 : i32
    return %c0_i32, %arg0 : i32, i32
  }
  func.func @transform_1(%arg0: i32, %arg1: i32) -> (i32, i32, i32) {
    %c0_i32 = arith.constant 0 : i32
    %c0_i32_0 = arith.constant 0 : i32
    %c0_i32_1 = arith.constant 0 : i32
    %c0_i32_2 = arith.constant 0 : i32
    return %c0_i32, %c0_i32_0, %c0_i32_1 : i32, i32, i32
  }
  func.func @transform_2(%arg0: i32, %arg1: i32) -> i32 {
    %c0_i32 = arith.constant 0 : i32
    %c0_i32_0 = arith.constant 0 : i32
    return %c0_i32 : i32
  }
  func.func @transform_3(%arg0: i32, %arg1: i32) -> (i32, i32, i32) {
    %c0_i32 = arith.constant 0 : i32
    %c0_i32_0 = arith.constant 0 : i32
    return %arg1, %c0_i32, %arg0 : i32, i32, i32
  }
  func.func @transform_4(%arg0: i32, %arg1: i32) -> (i32, i32) {
    %c0_i32 = arith.constant 0 : i32
    %c0_i32_0 = arith.constant 0 : i32
    return %c0_i32, %arg0 : i32, i32
  }
}

</mosaic_0001>

<llo_original>
// kernel: tpu_custom_call.1
$region0: #{tpu_custom_call.1}
  #allocation0 [shape = 'u32[]', space=smem, size = 0x4, offset = 0x4, fixed_abs, tag = 'smem constant byte address 0x4 - core index']
  #allocation1 [shape = 'u32[144,128]{1,0:T(1,128)}', space=vmem, size = 0x12000, scoped, tag = 'internal scratch']
  %s0 = inlined_call_operand.hbm [shape: f32[16,512], index: 0, kind: input, shape index: {}]
  %s1 = inlined_call_operand.hbm [shape: f32[8,16,16], index: 1, kind: input, shape index: {}]
  %s2 = inlined_call_operand.vmem [shape: f32[8], index: 2, kind: input, shape index: {}]
  %s3 = inlined_call_operand.hbm [shape: bf16[8,16,512], index: 3, kind: input, shape index: {}]
  %s4 = inlined_call_operand.hbm [shape: f32[16,512], index: 4, kind: output, shape index: {}]
  %s5 = sld [smem:[#allocation0]]
  $region77: #{tpu_custom_call.1} parent=0
    _
  %s7 = ssub.s32 1, %s5
  %s8 = scalar_select 0, %s7, %s5
  $region1: #{tpu_custom_call.1} parent=0
    #allocation2 [shape = 'u8[32768]{0}', space=vmem, size = 0x8000, scoped, tag = 'input window, operand 0']
    #allocation3 [shape = 's32[2]{0}', space=sflag, size = 0x8, scoped, tag = 'scoped memory for tpu_custom_call.1']
    #allocation4 [shape = 's32[2]{0}', space=sflag, size = 0x8, scoped, tag = 'scoped memory for tpu_custom_call.1']
    #allocation5 [shape = 's32[2]{0}', space=sflag, size = 0x8, scoped, tag = 'scoped memory for tpu_custom_call.1']
    #allocation6 [shape = 'u8[65536]{0}', space=vmem, size = 0x10000, scoped, tag = 'input window, operand 1, single buffered']
    #allocation7 [shape = 's32[1]{0}', space=sflag, size = 0x4, scoped, tag = 'scoped memory for tpu_custom_call.1']
    #allocation8 [shape = 'u8[512]{0}', space=smem, size = 0x200, scoped, tag = 'input window, operand 2, single buffered']
    #allocation9 [shape = 'u8[131072]{0}', space=vmem, size = 0x20000, scoped, tag = 'input window, operand 3']
    #allocation10 [shape = 'u8[32768]{0}', space=vmem, size = 0x8000, scoped, tag = 'output window, operand 0']
    %9 = vsyncpa [#allocation3], 0
    %s10 = scalar_lea.sflag [#allocation3], 1
    %11 = vsyncpa %s10, 0
    %12 = vsyncpa [#allocation7], 0
    %13 = vsyncpa [#allocation5], 0
    %14 = vsyncpa [#allocation4], 0
    %s15 = scalar_lea.sflag [#allocation4], 1
    %16 = vsyncpa %s15, 0
    loop: start=0, step=1, limit=4
    $region2: #{tpu_custom_call.1} parent=1 // loop_pre_header
      _
    $region3: #{tpu_custom_call.1} parent=1 // loop_header
      %s18 = sphi 0, %s22
      %p19 = scmp.ge.s32.totalorder %s18, 4
      %s25 = sphi 0, %s37
      %s26 = sphi 0, %s33
      %s27 = sphi 0, %s25
      %s28 = sphi 0, %s26
      %s29 = sphi 0, %s27
      %s30 = sphi 0, %s28
      %s40 = sphi 0, %s42
      %s43 = sphi 0, %s40
      %s44 = sphi 0, %s43
      %s60 = sphi 0, %s44
      %s64 = sphi 0, %s64
      %s66 = sphi 0, %s64
      %s67 = sphi 0, %s66
      %s81 = sphi 0, %s67
      %s85 = sphi 0, %s85
      %s87 = sphi 0, %s85
      %s88 = sphi 0, %s87
      %s102 = sphi 0, %s88
      %s110 = sphi 0, %s112
      %s113 = sphi 0, %s110
      %s114 = sphi 0, %s113
      %s130 = sphi 0, %s114
      %s136 = sphi 0, %s138
      %s139 = sphi 0, %s136
      %s140 = sphi 0, %s139
      %s156 = sphi 0, %s140
    $region4: #{tpu_custom_call.1} parent=1 // loop_header_branch
      %21 = sbr.rel (%p19) target = $region8
    $region5: #{tpu_custom_call.1} parent=1 // loop_body
      %s23 = ssub.s32 %s18, 1
      %s24 = ssub.s32 %s18, 2
      %s31 = sadd.s32 1, %s26
      %p32 = scmp.ge.s32.totalorder %s31, 1
      %s33 = scalar_select %p32, 0, %s31
      %s34 = sadd.s32 1, %s25
      %s35 = scalar_select %p32, %s34, %s25
      %p36 = scmp.ge.s32.totalorder %s35, 2
      %s37 = scalar_select %p36, 0, %s35
      %s38 = ssub.s32 %s25, %s37
      %p39 = scmp.eq.s32.totalorder %s38, 0
      %s41 = sadd.s32 %s40, 1
      %s42 = scalar_select %p39, %s40, %s41
      %p45 = pneg %p39
      %p46 = scmp.eq.s32.totalorder %s18, 1
      %p47 = por %p45, %p46
      %p48 = scmp.ne.s32.totalorder %s40, %s43
      %p49 = scmp.eq.s32.totalorder %s18, 0
      %p50 = por %p48, %p49
      %p51 = scmp.ne.s32.totalorder %s40, %s43
      %p52 = scmp.eq.s32.totalorder %s23, 1
      %p53 = por %p51, %p52
      %p54 = scmp.ne.s32.totalorder %s43, %s44
      %p55 = scmp.eq.s32.totalorder %s23, 0
      %p56 = por %p54, %p55
      %p57 = scmp.ne.s32.totalorder %s43, %s44
      %p58 = scmp.eq.s32.totalorder %s24, 1
      %p59 = por %p57, %p58
      %p61 = scmp.ne.s32.totalorder %s44, %s60
      %p62 = scmp.eq.s32.totalorder %s24, 0
      %p63 = por %p61, %p62
      %s65 = sadd.s32 %s64, 1
      %p68 = scmp.eq.s32.totalorder %s18, 1
      %p69 = scmp.ne.s32.totalorder %s64, %s66
      %p70 = scmp.eq.s32.totalorder %s18, 0
      %p71 = por %p69, %p70
      %p72 = scmp.ne.s32.totalorder %s64, %s66
      %p73 = scmp.eq.s32.totalorder %s23, 1
      %p74 = por %p72, %p73
      %p75 = scmp.ne.s32.totalorder %s66, %s67
      %p76 = scmp.eq.s32.totalorder %s23, 0
      %p77 = por %p75, %p76
      %p78 = scmp.ne.s32.totalorder %s66, %s67
      %p79 = scmp.eq.s32.totalorder %s24, 1
      %p80 = por %p78, %p79
      %p82 = scmp.ne.s32.totalorder %s67, %s81
      %p83 = scmp.eq.s32.totalorder %s24, 0
      %p84 = por %p82, %p83
      %s86 = sadd.s32 %s85, 1
      %p89 = scmp.eq.s32.totalorder %s18, 1
      %p90 = scmp.ne.s32.totalorder %s85, %s87
      %p91 = scmp.eq.s32.totalorder %s18, 0
      %p92 = por %p90, %p91
      %p93 = scmp.ne.s32.totalorder %s85, %s87
      %p94 = scmp.eq.s32.totalorder %s23, 1
      %p95 = por %p93, %p94
      %p96 = scmp.ne.s32.totalorder %s87, %s88
      %p97 = scmp.eq.s32.totalorder %s23, 0
      %p98 = por %p96, %p97
      %p99 = scmp.ne.s32.totalorder %s87, %s88
      %p100 = scmp.eq.s32.totalorder %s24, 1
      %p101 = por %p99, %p100
      %p103 = scmp.ne.s32.totalorder %s88, %s102
      %p104 = scmp.eq.s32.totalorder %s24, 0
      %p105 = por %p103, %p104
      %s106 = ssub.s32 %s26, %s33
      %s107 = ssub.s32 %s25, %s37
      %s108 = sor.u32 %s106, %s107
      %p109 = scmp.eq.s32.totalorder %s108, 0
      %s111 = sadd.s32 %s110, 1
      %s112 = scalar_select %p109, %s110, %s111
      %p115 = pneg %p109
      %p116 = scmp.eq.s32.totalorder %s18, 1
      %p117 = por %p115, %p116
      %p118 = scmp.ne.s32.totalorder %s110, %s113
      %p119 = scmp.eq.s32.totalorder %s18, 0
      %p120 = por %p118, %p119
      %p121 = scmp.ne.s32.totalorder %s110, %s113
      %p122 = scmp.eq.s32.totalorder %s23, 1
      %p123 = por %p121, %p122
      %p124 = scmp.ne.s32.totalorder %s113, %s114
      %p125 = scmp.eq.s32.totalorder %s23, 0
      %p126 = por %p124, %p125
      %p127 = scmp.ne.s32.totalorder %s113, %s114
      %p128 = scmp.eq.s32.totalorder %s24, 1
      %p129 = por %p127, %p128
      %p131 = scmp.ne.s32.totalorder %s114, %s130
      %p132 = scmp.eq.s32.totalorder %s24, 0
      %p133 = por %p131, %p132
      %s134 = ssub.s32 %s25, %s37
      %p135 = scmp.eq.s32.totalorder %s134, 0
      %s137 = sadd.s32 %s136, 1
      %s138 = scalar_select %p135, %s136, %s137
      %p141 = pneg %p135
      %p142 = scmp.eq.s32.totalorder %s18, 1
      %p143 = por %p141, %p142
      %p144 = scmp.ne.s32.totalorder %s136, %s139
      %p145 = scmp.eq.s32.totalorder %s18, 0
      %p146 = por %p144, %p145
      %p147 = scmp.ne.s32.totalorder %s136, %s139
      %p148 = scmp.eq.s32.totalorder %s23, 1
      %p149 = por %p147, %p148
      %p150 = scmp.ne.s32.totalorder %s139, %s140
      %p151 = scmp.eq.s32.totalorder %s23, 0
      %p152 = por %p150, %p151
      %p153 = scmp.ne.s32.totalorder %s139, %s140
      %p154 = scmp.eq.s32.totalorder %s24, 1
      %p155 = por %p153, %p154
      %p157 = scmp.ne.s32.totalorder %s140, %s156
      %p158 = scmp.eq.s32.totalorder %s24, 0
      %p159 = por %p157, %p158
      %p160 = scmp.le.s32.totalorder 1, %s18
      %p161 = scmp.lt.s32.totalorder %s18, 3
      %p162 = pnand %p160, %p161
      %p163 = pneg %p162
      // Predicated region
      $region9: #{tpu_custom_call.1} parent=5 // pred_check
        _
      $region10: #{tpu_custom_call.1} parent=5 // pred_check_branch
        %165 = sbr.rel (%p162) target = $region12
      $region11: #{tpu_custom_call.1} parent=5 // pred_region
        %s166 = ssub.s32 %s18, 1
        // Predicated region
        $region13: #{tpu_custom_call.1} parent=11 // pred_check
          %p167 = pneg %p77
        $region14: #{tpu_custom_call.1} parent=11 // pred_check_branch
          %169 = sbr.rel (%p167) target = $region16
        $region15: #{tpu_custom_call.1} parent=11 // pred_region
          %s171 = ssub.s32 2048, 2048
          %172 = vsyncadd [#allocation7], %s171
          %s173 = sshll.u32 [#allocation6], 4
          %s174 = int_to_ptr.vmem [resolvable:$true] %s173
          %179 = dma.hbm_to_vmem [thread:$0]  %s1, 2048, %s174, [#allocation7], 128, 128, 8
        $region16: #{tpu_custom_call.1} parent=11 // pred_fallthru
          _
        // Predicated region
        $region17: #{tpu_custom_call.1} parent=11 // pred_check
          %p180 = pneg %p98
        $region18: #{tpu_custom_call.1} parent=11 // pred_check_branch
          %182 = sbr.rel (%p180) target = $region20
        $region19: #{tpu_custom_call.1} parent=11 // pred_region
          %s184 = ssub.s32 16, 16
          %185 = vsyncadd [#allocation5], %s184
          %s187 = sshll.u32 %s2, 4
          %s188 = int_to_ptr.vmem [resolvable:$true] %s187
          %190 = dma.vmem_to_smem %s188, 16, [#allocation8], [#allocation5]
        $region20: #{tpu_custom_call.1} parent=11 // pred_fallthru
          _
      $region12: #{tpu_custom_call.1} parent=5 // pred_fallthru
        _
      %p191 = scmp.lt.s32.totalorder %s18, 2
      // Predicated region
      $region21: #{tpu_custom_call.1} parent=5 // pred_check
        %p192 = pneg %p191
      $region22: #{tpu_custom_call.1} parent=5 // pred_check_branch
        %194 = sbr.rel (%p192) target = $region24
      $region23: #{tpu_custom_call.1} parent=5 // pred_region
        // Predicated region
        $region25: #{tpu_custom_call.1} parent=23 // pred_check
          %p195 = pneg %p50
        $region26: #{tpu_custom_call.1} parent=23 // pred_check_branch
          %197 = sbr.rel (%p195) target = $region28
        $region27: #{tpu_custom_call.1} parent=23 // pred_region
          %s198 = sand.u32 %s18, 1
          %s199 = scalar_lea.sflag [#allocation3], %s198
          %s200 = sand.u32 %s40, 1
          %s201 = smul.addr %s200, 32
          %s202 = scalar_lea.vmem [#allocation2], %s201
          %s203 = smul.u32 2, %s25
          %s205 = ssub.s32 512, 512
          %206 = vsyncadd %s199, %s205
          %s207 = smul.addr %s203, 128
          %s208 = scalar_lea.hbm %s0, %s207
          %s209 = sshll.u32 %s202, 4
          %s210 = int_to_ptr.vmem [resolvable:$true] %s209
          %215 = dma.hbm_to_vmem [thread:$0]  %s208, 512, %s210, %s199, 512, 256, 16
        $region28: #{tpu_custom_call.1} parent=23 // pred_fallthru
          _
        // Predicated region
        $region29: #{tpu_custom_call.1} parent=23 // pred_check
          %p216 = pneg %p120
        $region30: #{tpu_custom_call.1} parent=23 // pred_check_branch
          %218 = sbr.rel (%p216) target = $region32
        $region31: #{tpu_custom_call.1} parent=23 // pred_region
          %s219 = sand.u32 %s18, 1
          %s220 = scalar_lea.sflag [#allocation3], %s219
          %s221 = sand.u32 %s110, 1
          %s222 = smul.addr %s221, 128
          %s223 = scalar_lea.vmem [#allocation9], %s222
          %s224 = smul.u32 8, %s26
          %s225 = smul.u32 2, %s25
          %s227 = ssub.s32 2048, 2048
          %228 = vsyncadd %s220, %s227
          %s229 = smul.addr %s224, 8
          %s230 = sadd.s32 %s225, %s229
          %s231 = smul.addr %s230, 64
          %s232 = scalar_lea.hbm %s3, %s231
          %s233 = sshll.u32 %s223, 4
          %s234 = int_to_ptr.vmem [resolvable:$true] %s233
          %239 = dma.hbm_to_vmem [thread:$0]  %s232, 2048, %s234, %s220, 256, 128, 8
        $region32: #{tpu_custom_call.1} parent=23 // pred_fallthru
          _
      $region24: #{tpu_custom_call.1} parent=5 // pred_fallthru
        _
      %p240 = scmp.le.s32.totalorder 1, %s18
      %p241 = scmp.lt.s32.totalorder %s18, 3
      %p242 = pnand %p240, %p241
      %p243 = pneg %p242
      // Predicated region
      $region33: #{tpu_custom_call.1} parent=5 // pred_check
        _
      $region34: #{tpu_custom_call.1} parent=5 // pred_check_branch
        %245 = sbr.rel (%p242) target = $region36
      $region35: #{tpu_custom_call.1} parent=5 // pred_region
        %s246 = ssub.s32 %s18, 1
        %s247 = sand.u32 %s23, 1
        %s248 = scalar_lea.sflag [#allocation3], %s247
        %s249 = sand.u32 %s43, 1
        %s250 = smul.addr %s249, 32
        %s251 = scalar_lea.vmem [#allocation2], %s250
        // Predicated region
        $region37: #{tpu_custom_call.1} parent=35 // pred_check
          %p252 = pneg %p56
        $region38: #{tpu_custom_call.1} parent=35 // pred_check_branch
          %254 = sbr.rel (%p252) target = $region40
        $region39: #{tpu_custom_call.1} parent=35 // pred_region
          %255 = dma.done %s248, 512
        $region40: #{tpu_custom_call.1} parent=35 // pred_fallthru
          _
        // Predicated region
        $region41: #{tpu_custom_call.1} parent=35 // pred_check
          %p256 = pneg %p77
        $region42: #{tpu_custom_call.1} parent=35 // pred_check_branch
          %258 = sbr.rel (%p256) target = $region44
        $region43: #{tpu_custom_call.1} parent=35 // pred_region
          %259 = dma.done [#allocation7], 2048
        $region44: #{tpu_custom_call.1} parent=35 // pred_fallthru
          _
        // Predicated region
        $region45: #{tpu_custom_call.1} parent=35 // pred_check
          %p260 = pneg %p98
        $region46: #{tpu_custom_call.1} parent=35 // pred_check_branch
          %262 = sbr.rel (%p260) target = $region48
        $region47: #{tpu_custom_call.1} parent=35 // pred_region
          %263 = dma.done [#allocation5], 16
        $region48: #{tpu_custom_call.1} parent=35 // pred_fallthru
          _
        %s264 = sand.u32 %s23, 1
        %s265 = scalar_lea.sflag [#allocation3], %s264
        %s266 = sand.u32 %s113, 1
        %s267 = smul.addr %s266, 128
        %s268 = scalar_lea.vmem [#allocation9], %s267
        // Predicated region
        $region49: #{tpu_custom_call.1} parent=35 // pred_check
          %p269 = pneg %p126
        $region50: #{tpu_custom_call.1} parent=35 // pred_check_branch
          %271 = sbr.rel (%p269) target = $region52
        $region51: #{tpu_custom_call.1} parent=35 // pred_region
          %272 = dma.done %s265, 2048
        $region52: #{tpu_custom_call.1} parent=35 // pred_fallthru
          _
        %273 = sfence
        %s274 = sand.u32 %s23, 1
        %s275 = scalar_lea.sflag [#allocation3], %s274
        %s276 = sand.u32 %s43, 1
        %s277 = smul.addr %s276, 32
        %s278 = scalar_lea.vmem [#allocation2], %s277
        %p279 = pneg %p56
        %p280 = pneg %p53
        %p281 = pneg %p77
        %p282 = pneg %p74
        %p283 = pneg %p98
        %p284 = pneg %p95
        %s285 = sand.u32 %s23, 1
        %s286 = scalar_lea.sflag [#allocation3], %s285
        %s287 = sand.u32 %s113, 1
        %s288 = smul.addr %s287, 128
        %s289 = scalar_lea.vmem [#allocation9], %s288
        %p290 = pneg %p126
        %p291 = pneg %p123
        %p292 = pneg %p152
        %p293 = pneg %p149
        %s294 = sand.u32 %s139, 1
        %s295 = scalar_lea.sflag [#allocation4], %s294
        %s296 = sand.u32 %s139, 1
        %s297 = smul.addr %s296, 32
        %s298 = scalar_lea.vmem [#allocation10], %s297
        %s299 = smul.u32 2, %s27
        %s300 = smul.u32 8, %s28
        %s301 = smul.u32 2, %s27
        %s302 = smul.u32 2, %s27
        %p303 = scmp.eq.s32.totalorder %s28, 0
        // Predicated region
        $region53: #{tpu_custom_call.1} parent=35 // pred_check
          %p304 = pneg %p303
        $region54: #{tpu_custom_call.1} parent=35 // pred_check_branch
          %306 = sbr.rel (%p304) target = $region56
        $region55: #{tpu_custom_call.1} parent=35 // pred_region
          %v307 = vld [vmem:[%s251] sm:$0xff]
          %v308 = vld [vmem:[%s251 + $0x8] sm:$0xff]
          %v309 = vld [vmem:[%s251 + $0x10] sm:$0xff]
          %v310 = vld [vmem:[%s251 + $0x18] sm:$0xff]
          %311 = vst [vmem:[%s298] sm:$0xff] %v307
          %312 = vst [vmem:[%s298 + $0x8] sm:$0xff] %v308
          %313 = vst [vmem:[%s298 + $0x10] sm:$0xff] %v309
          %314 = vst [vmem:[%s298 + $0x18] sm:$0xff] %v310
        $region56: #{tpu_custom_call.1} parent=35 // pred_fallthru
          _
        %v315 = vld [vmem:[%s298] sm:$0xff]
        %v316 = vld [vmem:[%s298 + $0x8] sm:$0xff]
        %v317 = vld [vmem:[%s298 + $0x10] sm:$0xff]
        %v318 = vld [vmem:[%s298 + $0x18] sm:$0xff]
        %s319 = smul.u32 %s28, 8
        %s320 = smul.u32 %s319, 16
        %s321 = scalar_lea.vmem [#allocation6], %s320
        %v322 = vld [vmem:[%s321] sm:$0xff]
        %v323 = vld [vmem:[%s321 + $0x8] sm:$0xff]
        %s324 = sld [smem:[#allocation8 + %s319]]
        %v325 = vld [vmem:[%s268] sm:$0xff]
        %v326 = vld [vmem:[%s268 + $0x8] sm:$0xff]
        %v327 = vunpack.c.l.bf16 %v325
        %v328 = vunpack.c.h.bf16 %v325
        %v329 = vunpack.c.l.bf16 %v326
        %v330 = vunpack.c.h.bf16 %v326
        %v331 = vstv %s324
        %v332 = vmul.f32 %v331, %v327
        %v333 = vmul.f32 %v331, %v328
        %v334 = vmul.f32 %v331, %v329
        %v335 = vmul.f32 %v331, %v330
        %vm336 = vcmask 130048
        %v338 = vsel %vm336, %v322, 0
        %v341 = vsel %vm336, %v323, 0
        %343 = vmatprep.subr.mxu0 0.0
        %344 = vmatpush1.msra.mxu0 0.0
        %345 = vmatprep.subr.mxu0 0.0
        %346 = vmatpush1.msra.mxu0 0.0
        %347 = vmatprep.subr.mxu0 0.0
        %348 = vmatpush1.msra.mxu0 0.0
        %349 = vmatprep.subr.mxu0 0.0
        %350 = vmatpush1.msra.mxu0 0.0
        %351 = vmatprep.subr.mxu0 0.0
        %352 = vmatpush1.msra.mxu0 0.0
        %353 = vmatprep.subr.mxu0 0.0
        %354 = vmatpush1.msra.mxu0 0.0
        %355 = vmatprep.subr.mxu0 0.0
        %356 = vmatpush1.msra.mxu0 0.0
        %357 = vmatprep.subr.mxu0 0.0
        %358 = vmatpush1.msra.mxu0 0.0
        %359 = vmatprep.subr.mxu0 0.0
        %360 = vmatpush1.msra.mxu0 0.0
        %361 = vmatprep.subr.mxu0 0.0
        %362 = vmatpush1.msra.mxu0 0.0
        %363 = vmatprep.subr.mxu0 0.0
        %364 = vmatpush1.msra.mxu0 0.0
        %365 = vmatprep.subr.mxu0 0.0
        %366 = vmatpush1.msra.mxu0 0.0
        %367 = vmatprep.subr.mxu0 0.0
        %368 = vmatpush1.msra.mxu0 0.0
        %369 = vmatprep.subr.mxu0 0.0
        %370 = vmatpush1.msra.mxu0 0.0
        %371 = vmatprep.subr.mxu0 %v318
        %372 = vmatpush1.msra.mxu0 %v317
        %373 = vmatprep.subr.mxu0 %v316
        %374 = vmatpush1.msra.mxu0 %v315
        %375 = vmatprep.subr.mxu0 0.0
        %376 = vmatpush2.msra.mxu0 0.0
        %377 = vmatprep.subr.mxu0 0.0
        %378 = vmatpush2.msra.mxu0 0.0
        %379 = vmatprep.subr.mxu0 0.0
        %380 = vmatpush2.msra.mxu0 0.0
        %381 = vmatprep.subr.mxu0 0.0
        %382 = vmatpush2.msra.mxu0 0.0
        %383 = vmatprep.subr.mxu0 0.0
        %384 = vmatpush2.msra.mxu0 0.0
        %385 = vmatprep.subr.mxu0 0.0
        %386 = vmatpush2.msra.mxu0 0.0
        %387 = vmatprep.subr.mxu0 0.0
        %388 = vmatpush2.msra.mxu0 0.0
        %389 = vmatprep.subr.mxu0 0.0
        %390 = vmatpush2.msra.mxu0 0.0
        %391 = vmatprep.subr.mxu0 0.0
        %392 = vmatpush2.msra.mxu0 0.0
        %393 = vmatprep.subr.mxu0 0.0
        %394 = vmatpush2.msra.mxu0 0.0
        %395 = vmatprep.subr.mxu0 0.0
        %396 = vmatpush2.msra.mxu0 0.0
        %397 = vmatprep.subr.mxu0 0.0
        %398 = vmatpush2.msra.mxu0 0.0
        %399 = vmatprep.subr.mxu0 0.0
        %400 = vmatpush2.msra.mxu0 0.0
        %401 = vmatprep.subr.mxu0 0.0
        %402 = vmatpush2.msra.mxu0 0.0
        %403 = vmatprep.subr.mxu0 0.0
        %404 = vmatpush2.msra.mxu0 0.0
        %405 = vmatprep.subr.mxu0 0.0
        %406 = vmatpush2.msra.mxu0 0.0
        %407 = vmatprep.mubr.f32.mxu0 0.0
        %408 = vmatmul.mubr.f32.gmra.mxu0 %v338
        %v409 = vpop.f32.mrf.mxu0
        %v410 = vadd.f32 %v332, %v409
        %v411 = vpop.f32.mrf.mxu0
        %v412 = vadd.f32 %v333, %v411
        %413 = vmatprep.mubr.f32.mxu0 0.0
        %414 = vmatmul.mubr.f32.gmra.mxu0 %v341
        %v415 = vpop.f32.mrf.mxu0
        %v416 = vadd.f32 %v334, %v415
        %v417 = vpop.f32.mrf.mxu0
        %v418 = vadd.f32 %v335, %v417
        %419 = vdwg.mxu0
        %s420 = sadd.s32 %s319, 1
        %s421 = smul.u32 %s420, 16
        %s422 = scalar_lea.vmem [#allocation6], %s421
        %v423 = vld [vmem:[%s422] sm:$0xff]
        %v424 = vld [vmem:[%s422 + $0x8] sm:$0xff]
        %s425 = sld [smem:[#allocation8 + %s420]]
        %s426 = scalar_lea.vmem %s268, 16 [#allocation9]
        %v427 = vld [vmem:[%s426] sm:$0xff]
        %v428 = vld [vmem:[%s426 + $0x8] sm:$0xff]
        %v429 = vunpack.c.l.bf16 %v427
        %v430 = vunpack.c.h.bf16 %v427
        %v431 = vunpack.c.l.bf16 %v428
        %v432 = vunpack.c.h.bf16 %v428
        %v433 = vstv %s425
        %v434 = vmul.f32 %v433, %v429
        %v435 = vmul.f32 %v433, %v430
        %v436 = vmul.f32 %v433, %v431
        %v437 = vmul.f32 %v433, %v432
        %v439 = vsel %vm336, %v423, 0
        %v442 = vsel %vm336, %v424, 0
        %444 = vmatprep.subr.mxu0 0.0
        %445 = vmatpush1.msra.mxu0 0.0
        %446 = vmatprep.subr.mxu0 0.0
        %447 = vmatpush1.msra.mxu0 0.0
        %448 = vmatprep.subr.mxu0 0.0
        %449 = vmatpush1.msra.mxu0 0.0
        %450 = vmatprep.subr.mxu0 0.0
        %451 = vmatpush1.msra.mxu0 0.0
        %452 = vmatprep.subr.mxu0 0.0
        %453 = vmatpush1.msra.mxu0 0.0
        %454 = vmatprep.subr.mxu0 0.0
        %455 = vmatpush1.msra.mxu0 0.0
        %456 = vmatprep.subr.mxu0 0.0
        %457 = vmatpush1.msra.mxu0 0.0
        %458 = vmatprep.subr.mxu0 0.0
        %459 = vmatpush1.msra.mxu0 0.0
        %460 = vmatprep.subr.mxu0 0.0
        %461 = vmatpush1.msra.mxu0 0.0
        %462 = vmatprep.subr.mxu0 0.0
        %463 = vmatpush1.msra.mxu0 0.0
        %464 = vmatprep.subr.mxu0 0.0
        %465 = vmatpush1.msra.mxu0 0.0
        %466 = vmatprep.subr.mxu0 0.0
        %467 = vmatpush1.msra.mxu0 0.0
        %468 = vmatprep.subr.mxu0 0.0
        %469 = vmatpush1.msra.mxu0 0.0
        %470 = vmatprep.subr.mxu0 0.0
        %471 = vmatpush1.msra.mxu0 0.0
        %472 = vmatprep.subr.mxu0 %v418
        %473 = vmatpush1.msra.mxu0 %v416
        %474 = vmatprep.subr.mxu0 %v412
        %475 = vmatpush1.msra.mxu0 %v410
        %476 = vmatprep.subr.mxu0 0.0
        %477 = vmatpush2.msra.mxu0 0.0
        %478 = vmatprep.subr.mxu0 0.0
        %479 = vmatpush2.msra.mxu0 0.0
        %480 = vmatprep.subr.mxu0 0.0
        %481 = vmatpush2.msra.mxu0 0.0
        %482 = vmatprep.subr.mxu0 0.0
        %483 = vmatpush2.msra.mxu0 0.0
        %484 = vmatprep.subr.mxu0 0.0
        %485 = vmatpush2.msra.mxu0 0.0
        %486 = vmatprep.subr.mxu0 0.0
        %487 = vmatpush2.msra.mxu0 0.0
        %488 = vmatprep.subr.mxu0 0.0
        %489 = vmatpush2.msra.mxu0 0.0
        %490 = vmatprep.subr.mxu0 0.0
        %491 = vmatpush2.msra.mxu0 0.0
        %492 = vmatprep.subr.mxu0 0.0
        %493 = vmatpush2.msra.mxu0 0.0
        %494 = vmatprep.subr.mxu0 0.0
        %495 = vmatpush2.msra.mxu0 0.0
        %496 = vmatprep.subr.mxu0 0.0
        %497 = vmatpush2.msra.mxu0 0.0
        %498 = vmatprep.subr.mxu0 0.0
        %499 = vmatpush2.msra.mxu0 0.0
        %500 = vmatprep.subr.mxu0 0.0
        %501 = vmatpush2.msra.mxu0 0.0
        %502 = vmatprep.subr.mxu0 0.0
        %503 = vmatpush2.msra.mxu0 0.0
        %504 = vmatprep.subr.mxu0 0.0
        %505 = vmatpush2.msra.mxu0 0.0
        %506 = vmatprep.subr.mxu0 0.0
        %507 = vmatpush2.msra.mxu0 0.0
        %508 = vmatprep.mubr.f32.mxu0 0.0
        %509 = vmatmul.mubr.f32.gmra.mxu0 %v439
        %v510 = vpop.f32.mrf.mxu0
        %v511 = vadd.f32 %v434, %v510
        %v512 = vpop.f32.mrf.mxu0
        %v513 = vadd.f32 %v435, %v512
        %514 = vmatprep.mubr.f32.mxu0 0.0
        %515 = vmatmul.mubr.f32.gmra.mxu0 %v442
        %v516 = vpop.f32.mrf.mxu0
        %v517 = vadd.f32 %v436, %v516
        %v518 = vpop.f32.mrf.mxu0
        %v519 = vadd.f32 %v437, %v518
        %520 = vdwg.mxu0
        %s521 = sadd.s32 %s319, 2
        %s522 = smul.u32 %s521, 16
        %s523 = scalar_lea.vmem [#allocation6], %s522
        %v524 = vld [vmem:[%s523] sm:$0xff]
        %v525 = vld [vmem:[%s523 + $0x8] sm:$0xff]
        %s526 = sld [smem:[#allocation8 + %s521]]
        %s527 = scalar_lea.vmem %s268, 32 [#allocation9]
        %v528 = vld [vmem:[%s527] sm:$0xff]
        %v529 = vld [vmem:[%s527 + $0x8] sm:$0xff]
        %v530 = vunpack.c.l.bf16 %v528
        %v531 = vunpack.c.h.bf16 %v528
        %v532 = vunpack.c.l.bf16 %v529
        %v533 = vunpack.c.h.bf16 %v529
        %v534 = vstv %s526
        %v535 = vmul.f32 %v534, %v530
        %v536 = vmul.f32 %v534, %v531
        %v537 = vmul.f32 %v534, %v532
        %v538 = vmul.f32 %v534, %v533
        %v540 = vsel %vm336, %v524, 0
        %v543 = vsel %vm336, %v525, 0
        %545 = vmatprep.subr.mxu0 0.0
        %546 = vmatpush1.msra.mxu0 0.0
        %547 = vmatprep.subr.mxu0 0.0
        %548 = vmatpush1.msra.mxu0 0.0
        %549 = vmatprep.subr.mxu0 0.0
        %550 = vmatpush1.msra.mxu0 0.0
        %551 = vmatprep.subr.mxu0 0.0
        %552 = vmatpush1.msra.mxu0 0.0
        %553 = vmatprep.subr.mxu0 0.0
        %554 = vmatpush1.msra.mxu0 0.0
        %555 = vmatprep.subr.mxu0 0.0
        %556 = vmatpush1.msra.mxu0 0.0
        %557 = vmatprep.subr.mxu0 0.0
        %558 = vmatpush1.msra.mxu0 0.0
        %559 = vmatprep.subr.mxu0 0.0
        %560 = vmatpush1.msra.mxu0 0.0
        %561 = vmatprep.subr.mxu0 0.0
        %562 = vmatpush1.msra.mxu0 0.0
        %563 = vmatprep.subr.mxu0 0.0
        %564 = vmatpush1.msra.mxu0 0.0
        %565 = vmatprep.subr.mxu0 0.0
        %566 = vmatpush1.msra.mxu0 0.0
        %567 = vmatprep.subr.mxu0 0.0
        %568 = vmatpush1.msra.mxu0 0.0
        %569 = vmatprep.subr.mxu0 0.0
        %570 = vmatpush1.msra.mxu0 0.0
        %571 = vmatprep.subr.mxu0 0.0
        %572 = vmatpush1.msra.mxu0 0.0
        %573 = vmatprep.subr.mxu0 %v519
        %574 = vmatpush1.msra.mxu0 %v517
        %575 = vmatprep.subr.mxu0 %v513
        %576 = vmatpush1.msra.mxu0 %v511
        %577 = vmatprep.subr.mxu0 0.0
        %578 = vmatpush2.msra.mxu0 0.0
        %579 = vmatprep.subr.mxu0 0.0
        %580 = vmatpush2.msra.mxu0 0.0
        %581 = vmatprep.subr.mxu0 0.0
        %582 = vmatpush2.msra.mxu0 0.0
        %583 = vmatprep.subr.mxu0 0.0
        %584 = vmatpush2.msra.mxu0 0.0
        %585 = vmatprep.subr.mxu0 0.0
        %586 = vmatpush2.msra.mxu0 0.0
        %587 = vmatprep.subr.mxu0 0.0
        %588 = vmatpush2.msra.mxu0 0.0
        %589 = vmatprep.subr.mxu0 0.0
        %590 = vmatpush2.msra.mxu0 0.0
        %591 = vmatprep.subr.mxu0 0.0
        %592 = vmatpush2.msra.mxu0 0.0
        %593 = vmatprep.subr.mxu0 0.0
        %594 = vmatpush2.msra.mxu0 0.0
        %595 = vmatprep.subr.mxu0 0.0
        %596 = vmatpush2.msra.mxu0 0.0
        %597 = vmatprep.subr.mxu0 0.0
        %598 = vmatpush2.msra.mxu0 0.0
        %599 = vmatprep.subr.mxu0 0.0
        %600 = vmatpush2.msra.mxu0 0.0
        %601 = vmatprep.subr.mxu0 0.0
        %602 = vmatpush2.msra.mxu0 0.0
        %603 = vmatprep.subr.mxu0 0.0
        %604 = vmatpush2.msra.mxu0 0.0
        %605 = vmatprep.subr.mxu0 0.0
        %606 = vmatpush2.msra.mxu0 0.0
        %607 = vmatprep.subr.mxu0 0.0
        %608 = vmatpush2.msra.mxu0 0.0
        %609 = vmatprep.mubr.f32.mxu0 0.0
        %610 = vmatmul.mubr.f32.gmra.mxu0 %v540
        %v611 = vpop.f32.mrf.mxu0
        %v612 = vadd.f32 %v535, %v611
        %v613 = vpop.f32.mrf.mxu0
        %v614 = vadd.f32 %v536, %v613
        %615 = vmatprep.mubr.f32.mxu0 0.0
        %616 = vmatmul.mubr.f32.gmra.mxu0 %v543
        %v617 = vpop.f32.mrf.mxu0
        %v618 = vadd.f32 %v537, %v617
        %v619 = vpop.f32.mrf.mxu0
        %v620 = vadd.f32 %v538, %v619
        %621 = vdwg.mxu0
        %s622 = sadd.s32 %s319, 3
        %s623 = smul.u32 %s622, 16
        %s624 = scalar_lea.vmem [#allocation6], %s623
        %v625 = vld [vmem:[%s624] sm:$0xff]
        %v626 = vld [vmem:[%s624 + $0x8] sm:$0xff]
        %s627 = sld [smem:[#allocation8 + %s622]]
        %s628 = scalar_lea.vmem %s268, 48 [#allocation9]
        %v629 = vld [vmem:[%s628] sm:$0xff]
        %v630 = vld [vmem:[%s628 + $0x8] sm:$0xff]
        %v631 = vunpack.c.l.bf16 %v629
        %v632 = vunpack.c.h.bf16 %v629
        %v633 = vunpack.c.l.bf16 %v630
        %v634 = vunpack.c.h.bf16 %v630
        %v635 = vstv %s627
        %v636 = vmul.f32 %v635, %v631
        %v637 = vmul.f32 %v635, %v632
        %v638 = vmul.f32 %v635, %v633
        %v639 = vmul.f32 %v635, %v634
        %v641 = vsel %vm336, %v625, 0
        %v644 = vsel %vm336, %v626, 0
        %646 = vmatprep.subr.mxu0 0.0
        %647 = vmatpush1.msra.mxu0 0.0
        %648 = vmatprep.subr.mxu0 0.0
        %649 = vmatpush1.msra.mxu0 0.0
        %650 = vmatprep.subr.mxu0 0.0
        %651 = vmatpush1.msra.mxu0 0.0
        %652 = vmatprep.subr.mxu0 0.0
        %653 = vmatpush1.msra.mxu0 0.0
        %654 = vmatprep.subr.mxu0 0.0
        %655 = vmatpush1.msra.mxu0 0.0
        %656 = vmatprep.subr.mxu0 0.0
        %657 = vmatpush1.msra.mxu0 0.0
        %658 = vmatprep.subr.mxu0 0.0
        %659 = vmatpush1.msra.mxu0 0.0
        %660 = vmatprep.subr.mxu0 0.0
        %661 = vmatpush1.msra.mxu0 0.0
        %662 = vmatprep.subr.mxu0 0.0
        %663 = vmatpush1.msra.mxu0 0.0
        %664 = vmatprep.subr.mxu0 0.0
        %665 = vmatpush1.msra.mxu0 0.0
        %666 = vmatprep.subr.mxu0 0.0
        %667 = vmatpush1.msra.mxu0 0.0
        %668 = vmatprep.subr.mxu0 0.0
        %669 = vmatpush1.msra.mxu0 0.0
        %670 = vmatprep.subr.mxu0 0.0
        %671 = vmatpush1.msra.mxu0 0.0
        %672 = vmatprep.subr.mxu0 0.0
        %673 = vmatpush1.msra.mxu0 0.0
        %674 = vmatprep.subr.mxu0 %v620
        %675 = vmatpush1.msra.mxu0 %v618
        %676 = vmatprep.subr.mxu0 %v614
        %677 = vmatpush1.msra.mxu0 %v612
        %678 = vmatprep.subr.mxu0 0.0
        %679 = vmatpush2.msra.mxu0 0.0
        %680 = vmatprep.subr.mxu0 0.0
        %681 = vmatpush2.msra.mxu0 0.0
        %682 = vmatprep.subr.mxu0 0.0
        %683 = vmatpush2.msra.mxu0 0.0
        %684 = vmatprep.subr.mxu0 0.0
        %685 = vmatpush2.msra.mxu0 0.0
        %686 = vmatprep.subr.mxu0 0.0
        %687 = vmatpush2.msra.mxu0 0.0
        %688 = vmatprep.subr.mxu0 0.0
        %689 = vmatpush2.msra.mxu0 0.0
        %690 = vmatprep.subr.mxu0 0.0
        %691 = vmatpush2.msra.mxu0 0.0
        %692 = vmatprep.subr.mxu0 0.0
        %693 = vmatpush2.msra.mxu0 0.0
        %694 = vmatprep.subr.mxu0 0.0
        %695 = vmatpush2.msra.mxu0 0.0
        %696 = vmatprep.subr.mxu0 0.0
        %697 = vmatpush2.msra.mxu0 0.0
        %698 = vmatprep.subr.mxu0 0.0
        %699 = vmatpush2.msra.mxu0 0.0
        %700 = vmatprep.subr.mxu0 0.0
        %701 = vmatpush2.msra.mxu0 0.0
        %702 = vmatprep.subr.mxu0 0.0
        %703 = vmatpush2.msra.mxu0 0.0
        %704 = vmatprep.subr.mxu0 0.0
        %705 = vmatpush2.msra.mxu0 0.0
        %706 = vmatprep.subr.mxu0 0.0
        %707 = vmatpush2.msra.mxu0 0.0
        %708 = vmatprep.subr.mxu0 0.0
        %709 = vmatpush2.msra.mxu0 0.0
        %710 = vmatprep.mubr.f32.mxu0 0.0
        %711 = vmatmul.mubr.f32.gmra.mxu0 %v641
        %v712 = vpop.f32.mrf.mxu0
        %v713 = vadd.f32 %v636, %v712
        %v714 = vpop.f32.mrf.mxu0
        %v715 = vadd.f32 %v637, %v714
        %716 = vmatprep.mubr.f32.mxu0 0.0
        %717 = vmatmul.mubr.f32.gmra.mxu0 %v644
        %v718 = vpop.f32.mrf.mxu0
        %v719 = vadd.f32 %v638, %v718
        %v720 = vpop.f32.mrf.mxu0
        %v721 = vadd.f32 %v639, %v720
        %722 = vdwg.mxu0
        %s723 = sadd.s32 %s319, 4
        %s724 = smul.u32 %s723, 16
        %s725 = scalar_lea.vmem [#allocation6], %s724
        %v726 = vld [vmem:[%s725] sm:$0xff]
        %v727 = vld [vmem:[%s725 + $0x8] sm:$0xff]
        %s728 = sld [smem:[#allocation8 + %s723]]
        %s729 = scalar_lea.vmem %s268, 64 [#allocation9]
        %v730 = vld [vmem:[%s729] sm:$0xff]
        %v731 = vld [vmem:[%s729 + $0x8] sm:$0xff]
        %v732 = vunpack.c.l.bf16 %v730
        %v733 = vunpack.c.h.bf16 %v730
        %v734 = vunpack.c.l.bf16 %v731
        %v735 = vunpack.c.h.bf16 %v731
        %v736 = vstv %s728
        %v737 = vmul.f32 %v736, %v732
        %v738 = vmul.f32 %v736, %v733
        %v739 = vmul.f32 %v736, %v734
        %v740 = vmul.f32 %v736, %v735
        %v742 = vsel %vm336, %v726, 0
        %v745 = vsel %vm336, %v727, 0
        %747 = vmatprep.subr.mxu0 0.0
        %748 = vmatpush1.msra.mxu0 0.0
        %749 = vmatprep.subr.mxu0 0.0
        %750 = vmatpush1.msra.mxu0 0.0
        %751 = vmatprep.subr.mxu0 0.0
        %752 = vmatpush1.msra.mxu0 0.0
        %753 = vmatprep.subr.mxu0 0.0
        %754 = vmatpush1.msra.mxu0 0.0
        %755 = vmatprep.subr.mxu0 0.0
        %756 = vmatpush1.msra.mxu0 0.0
        %757 = vmatprep.subr.mxu0 0.0
        %758 = vmatpush1.msra.mxu0 0.0
        %759 = vmatprep.subr.mxu0 0.0
        %760 = vmatpush1.msra.mxu0 0.0
        %761 = vmatprep.subr.mxu0 0.0
        %762 = vmatpush1.msra.mxu0 0.0
        %763 = vmatprep.subr.mxu0 0.0
        %764 = vmatpush1.msra.mxu0 0.0
        %765 = vmatprep.subr.mxu0 0.0
        %766 = vmatpush1.msra.mxu0 0.0
        %767 = vmatprep.subr.mxu0 0.0
        %768 = vmatpush1.msra.mxu0 0.0
        %769 = vmatprep.subr.mxu0 0.0
        %770 = vmatpush1.msra.mxu0 0.0
        %771 = vmatprep.subr.mxu0 0.0
        %772 = vmatpush1.msra.mxu0 0.0
        %773 = vmatprep.subr.mxu0 0.0
        %774 = vmatpush1.msra.mxu0 0.0
        %775 = vmatprep.subr.mxu0 %v721
        %776 = vmatpush1.msra.mxu0 %v719
        %777 = vmatprep.subr.mxu0 %v715
        %778 = vmatpush1.msra.mxu0 %v713
        %779 = vmatprep.subr.mxu0 0.0
        %780 = vmatpush2.msra.mxu0 0.0
        %781 = vmatprep.subr.mxu0 0.0
        %782 = vmatpush2.msra.mxu0 0.0
        %783 = vmatprep.subr.mxu0 0.0
        %784 = vmatpush2.msra.mxu0 0.0
        %785 = vmatprep.subr.mxu0 0.0
        %786 = vmatpush2.msra.mxu0 0.0
        %787 = vmatprep.subr.mxu0 0.0
        %788 = vmatpush2.msra.mxu0 0.0
        %789 = vmatprep.subr.mxu0 0.0
        %790 = vmatpush2.msra.mxu0 0.0
        %791 = vmatprep.subr.mxu0 0.0
        %792 = vmatpush2.msra.mxu0 0.0
        %793 = vmatprep.subr.mxu0 0.0
        %794 = vmatpush2.msra.mxu0 0.0
        %795 = vmatprep.subr.mxu0 0.0
        %796 = vmatpush2.msra.mxu0 0.0
        %797 = vmatprep.subr.mxu0 0.0
        %798 = vmatpush2.msra.mxu0 0.0
        %799 = vmatprep.subr.mxu0 0.0
        %800 = vmatpush2.msra.mxu0 0.0
        %801 = vmatprep.subr.mxu0 0.0
        %802 = vmatpush2.msra.mxu0 0.0
        %803 = vmatprep.subr.mxu0 0.0
        %804 = vmatpush2.msra.mxu0 0.0
        %805 = vmatprep.subr.mxu0 0.0
        %806 = vmatpush2.msra.mxu0 0.0
        %807 = vmatprep.subr.mxu0 0.0
        %808 = vmatpush2.msra.mxu0 0.0
        %809 = vmatprep.subr.mxu0 0.0
        %810 = vmatpush2.msra.mxu0 0.0
        %811 = vmatprep.mubr.f32.mxu0 0.0
        %812 = vmatmul.mubr.f32.gmra.mxu0 %v742
        %v813 = vpop.f32.mrf.mxu0
        %v814 = vadd.f32 %v737, %v813
        %v815 = vpop.f32.mrf.mxu0
        %v816 = vadd.f32 %v738, %v815
        %817 = vmatprep.mubr.f32.mxu0 0.0
        %818 = vmatmul.mubr.f32.gmra.mxu0 %v745
        %v819 = vpop.f32.mrf.mxu0
        %v820 = vadd.f32 %v739, %v819
        %v821 = vpop.f32.mrf.mxu0
        %v822 = vadd.f32 %v740, %v821
        %823 = vdwg.mxu0
        %s824 = sadd.s32 %s319, 5
        %s825 = smul.u32 %s824, 16
        %s826 = scalar_lea.vmem [#allocation6], %s825
        %v827 = vld [vmem:[%s826] sm:$0xff]
        %v828 = vld [vmem:[%s826 + $0x8] sm:$0xff]
        %s829 = sld [smem:[#allocation8 + %s824]]
        %s830 = scalar_lea.vmem %s268, 80 [#allocation9]
        %v831 = vld [vmem:[%s830] sm:$0xff]
        %v832 = vld [vmem:[%s830 + $0x8] sm:$0xff]
        %v833 = vunpack.c.l.bf16 %v831
        %v834 = vunpack.c.h.bf16 %v831
        %v835 = vunpack.c.l.bf16 %v832
        %v836 = vunpack.c.h.bf16 %v832
        %v837 = vstv %s829
        %v838 = vmul.f32 %v837, %v833
        %v839 = vmul.f32 %v837, %v834
        %v840 = vmul.f32 %v837, %v835
        %v841 = vmul.f32 %v837, %v836
        %v843 = vsel %vm336, %v827, 0
        %v846 = vsel %vm336, %v828, 0
        %848 = vmatprep.subr.mxu0 0.0
        %849 = vmatpush1.msra.mxu0 0.0
        %850 = vmatprep.subr.mxu0 0.0
        %851 = vmatpush1.msra.mxu0 0.0
        %852 = vmatprep.subr.mxu0 0.0
        %853 = vmatpush1.msra.mxu0 0.0
        %854 = vmatprep.subr.mxu0 0.0
        %855 = vmatpush1.msra.mxu0 0.0
        %856 = vmatprep.subr.mxu0 0.0
        %857 = vmatpush1.msra.mxu0 0.0
        %858 = vmatprep.subr.mxu0 0.0
        %859 = vmatpush1.msra.mxu0 0.0
        %860 = vmatprep.subr.mxu0 0.0
        %861 = vmatpush1.msra.mxu0 0.0
        %862 = vmatprep.subr.mxu0 0.0
        %863 = vmatpush1.msra.mxu0 0.0
        %864 = vmatprep.subr.mxu0 0.0
        %865 = vmatpush1.msra.mxu0 0.0
        %866 = vmatprep.subr.mxu0 0.0
        %867 = vmatpush1.msra.mxu0 0.0
        %868 = vmatprep.subr.mxu0 0.0
        %869 = vmatpush1.msra.mxu0 0.0
        %870 = vmatprep.subr.mxu0 0.0
        %871 = vmatpush1.msra.mxu0 0.0
        %872 = vmatprep.subr.mxu0 0.0
        %873 = vmatpush1.msra.mxu0 0.0
        %874 = vmatprep.subr.mxu0 0.0
        %875 = vmatpush1.msra.mxu0 0.0
        %876 = vmatprep.subr.mxu0 %v822
        %877 = vmatpush1.msra.mxu0 %v820
        %878 = vmatprep.subr.mxu0 %v816
        %879 = vmatpush1.msra.mxu0 %v814
        %880 = vmatprep.subr.mxu0 0.0
        %881 = vmatpush2.msra.mxu0 0.0
        %882 = vmatprep.subr.mxu0 0.0
        %883 = vmatpush2.msra.mxu0 0.0
        %884 = vmatprep.subr.mxu0 0.0
        %885 = vmatpush2.msra.mxu0 0.0
        %886 = vmatprep.subr.mxu0 0.0
        %887 = vmatpush2.msra.mxu0 0.0
        %888 = vmatprep.subr.mxu0 0.0
        %889 = vmatpush2.msra.mxu0 0.0
        %890 = vmatprep.subr.mxu0 0.0
        %891 = vmatpush2.msra.mxu0 0.0
        %892 = vmatprep.subr.mxu0 0.0
        %893 = vmatpush2.msra.mxu0 0.0
        %894 = vmatprep.subr.mxu0 0.0
        %895 = vmatpush2.msra.mxu0 0.0
        %896 = vmatprep.subr.mxu0 0.0
        %897 = vmatpush2.msra.mxu0 0.0
        %898 = vmatprep.subr.mxu0 0.0
        %899 = vmatpush2.msra.mxu0 0.0
        %900 = vmatprep.subr.mxu0 0.0
        %901 = vmatpush2.msra.mxu0 0.0
        %902 = vmatprep.subr.mxu0 0.0
        %903 = vmatpush2.msra.mxu0 0.0
        %904 = vmatprep.subr.mxu0 0.0
        %905 = vmatpush2.msra.mxu0 0.0
        %906 = vmatprep.subr.mxu0 0.0
        %907 = vmatpush2.msra.mxu0 0.0
        %908 = vmatprep.subr.mxu0 0.0
        %909 = vmatpush2.msra.mxu0 0.0
        %910 = vmatprep.subr.mxu0 0.0
        %911 = vmatpush2.msra.mxu0 0.0
        %912 = vmatprep.mubr.f32.mxu0 0.0
        %913 = vmatmul.mubr.f32.gmra.mxu0 %v843
        %v914 = vpop.f32.mrf.mxu0
        %v915 = vadd.f32 %v838, %v914
        %v916 = vpop.f32.mrf.mxu0
        %v917 = vadd.f32 %v839, %v916
        %918 = vmatprep.mubr.f32.mxu0 0.0
        %919 = vmatmul.mubr.f32.gmra.mxu0 %v846
        %v920 = vpop.f32.mrf.mxu0
        %v921 = vadd.f32 %v840, %v920
        %v922 = vpop.f32.mrf.mxu0
        %v923 = vadd.f32 %v841, %v922
        %924 = vdwg.mxu0
        %s925 = sadd.s32 %s319, 6
        %s926 = smul.u32 %s925, 16
        %s927 = scalar_lea.vmem [#allocation6], %s926
        %v928 = vld [vmem:[%s927] sm:$0xff]
        %v929 = vld [vmem:[%s927 + $0x8] sm:$0xff]
        %s930 = sld [smem:[#allocation8 + %s925]]
        %s931 = scalar_lea.vmem %s268, 96 [#allocation9]
        %v932 = vld [vmem:[%s931] sm:$0xff]
        %v933 = vld [vmem:[%s931 + $0x8] sm:$0xff]
        %v934 = vunpack.c.l.bf16 %v932
        %v935 = vunpack.c.h.bf16 %v932
        %v936 = vunpack.c.l.bf16 %v933
        %v937 = vunpack.c.h.bf16 %v933
        %v938 = vstv %s930
        %v939 = vmul.f32 %v938, %v934
        %v940 = vmul.f32 %v938, %v935
        %v941 = vmul.f32 %v938, %v936
        %v942 = vmul.f32 %v938, %v937
        %v944 = vsel %vm336, %v928, 0
        %v947 = vsel %vm336, %v929, 0
        %949 = vmatprep.subr.mxu0 0.0
        %950 = vmatpush1.msra.mxu0 0.0
        %951 = vmatprep.subr.mxu0 0.0
        %952 = vmatpush1.msra.mxu0 0.0
        %953 = vmatprep.subr.mxu0 0.0
        %954 = vmatpush1.msra.mxu0 0.0
        %955 = vmatprep.subr.mxu0 0.0
        %956 = vmatpush1.msra.mxu0 0.0
        %957 = vmatprep.subr.mxu0 0.0
        %958 = vmatpush1.msra.mxu0 0.0
        %959 = vmatprep.subr.mxu0 0.0
        %960 = vmatpush1.msra.mxu0 0.0
        %961 = vmatprep.subr.mxu0 0.0
        %962 = vmatpush1.msra.mxu0 0.0
        %963 = vmatprep.subr.mxu0 0.0
        %964 = vmatpush1.msra.mxu0 0.0
        %965 = vmatprep.subr.mxu0 0.0
        %966 = vmatpush1.msra.mxu0 0.0
        %967 = vmatprep.subr.mxu0 0.0
        %968 = vmatpush1.msra.mxu0 0.0
        %969 = vmatprep.subr.mxu0 0.0
        %970 = vmatpush1.msra.mxu0 0.0
        %971 = vmatprep.subr.mxu0 0.0
        %972 = vmatpush1.msra.mxu0 0.0
        %973 = vmatprep.subr.mxu0 0.0
        %974 = vmatpush1.msra.mxu0 0.0
        %975 = vmatprep.subr.mxu0 0.0
        %976 = vmatpush1.msra.mxu0 0.0
        %977 = vmatprep.subr.mxu0 %v923
        %978 = vmatpush1.msra.mxu0 %v921
        %979 = vmatprep.subr.mxu0 %v917
        %980 = vmatpush1.msra.mxu0 %v915
        %981 = vmatprep.subr.mxu0 0.0
        %982 = vmatpush2.msra.mxu0 0.0
        %983 = vmatprep.subr.mxu0 0.0
        %984 = vmatpush2.msra.mxu0 0.0
        %985 = vmatprep.subr.mxu0 0.0
        %986 = vmatpush2.msra.mxu0 0.0
        %987 = vmatprep.subr.mxu0 0.0
        %988 = vmatpush2.msra.mxu0 0.0
        %989 = vmatprep.subr.mxu0 0.0
        %990 = vmatpush2.msra.mxu0 0.0
        %991 = vmatprep.subr.mxu0 0.0
        %992 = vmatpush2.msra.mxu0 0.0
        %993 = vmatprep.subr.mxu0 0.0
        %994 = vmatpush2.msra.mxu0 0.0
        %995 = vmatprep.subr.mxu0 0.0
        %996 = vmatpush2.msra.mxu0 0.0
        %997 = vmatprep.subr.mxu0 0.0
        %998 = vmatpush2.msra.mxu0 0.0
        %999 = vmatprep.subr.mxu0 0.0
        %1000 = vmatpush2.msra.mxu0 0.0
        %1001 = vmatprep.subr.mxu0 0.0
        %1002 = vmatpush2.msra.mxu0 0.0
        %1003 = vmatprep.subr.mxu0 0.0
        %1004 = vmatpush2.msra.mxu0 0.0
        %1005 = vmatprep.subr.mxu0 0.0
        %1006 = vmatpush2.msra.mxu0 0.0
        %1007 = vmatprep.subr.mxu0 0.0
        %1008 = vmatpush2.msra.mxu0 0.0
        %1009 = vmatprep.subr.mxu0 0.0
        %1010 = vmatpush2.msra.mxu0 0.0
        %1011 = vmatprep.subr.mxu0 0.0
        %1012 = vmatpush2.msra.mxu0 0.0
        %1013 = vmatprep.mubr.f32.mxu0 0.0
        %1014 = vmatmul.mubr.f32.gmra.mxu0 %v944
        %v1015 = vpop.f32.mrf.mxu0
        %v1016 = vadd.f32 %v939, %v1015
        %v1017 = vpop.f32.mrf.mxu0
        %v1018 = vadd.f32 %v940, %v1017
        %1019 = vmatprep.mubr.f32.mxu0 0.0
        %1020 = vmatmul.mubr.f32.gmra.mxu0 %v947
        %v1021 = vpop.f32.mrf.mxu0
        %v1022 = vadd.f32 %v941, %v1021
        %v1023 = vpop.f32.mrf.mxu0
        %v1024 = vadd.f32 %v942, %v1023
        %1025 = vdwg.mxu0
        %s1026 = sadd.s32 %s319, 7
        %s1027 = smul.u32 %s1026, 16
        %s1028 = scalar_lea.vmem [#allocation6], %s1027
        %v1029 = vld [vmem:[%s1028] sm:$0xff]
        %v1030 = vld [vmem:[%s1028 + $0x8] sm:$0xff]
        %s1031 = sld [smem:[#allocation8 + %s1026]]
        %s1032 = scalar_lea.vmem %s268, 112 [#allocation9]
        %v1033 = vld [vmem:[%s1032] sm:$0xff]
        %v1034 = vld [vmem:[%s1032 + $0x8] sm:$0xff]
        %v1035 = vunpack.c.l.bf16 %v1033
        %v1036 = vunpack.c.h.bf16 %v1033
        %v1037 = vunpack.c.l.bf16 %v1034
        %v1038 = vunpack.c.h.bf16 %v1034
        %v1039 = vstv %s1031
        %v1040 = vmul.f32 %v1039, %v1035
        %v1041 = vmul.f32 %v1039, %v1036
        %v1042 = vmul.f32 %v1039, %v1037
        %v1043 = vmul.f32 %v1039, %v1038
        %v1045 = vsel %vm336, %v1029, 0
        %v1048 = vsel %vm336, %v1030, 0
        %1050 = vmatprep.subr.mxu0 0.0
        %1051 = vmatpush1.msra.mxu0 0.0
        %1052 = vmatprep.subr.mxu0 0.0
        %1053 = vmatpush1.msra.mxu0 0.0
        %1054 = vmatprep.subr.mxu0 0.0
        %1055 = vmatpush1.msra.mxu0 0.0
        %1056 = vmatprep.subr.mxu0 0.0
        %1057 = vmatpush1.msra.mxu0 0.0
        %1058 = vmatprep.subr.mxu0 0.0
        %1059 = vmatpush1.msra.mxu0 0.0
        %1060 = vmatprep.subr.mxu0 0.0
        %1061 = vmatpush1.msra.mxu0 0.0
        %1062 = vmatprep.subr.mxu0 0.0
        %1063 = vmatpush1.msra.mxu0 0.0
        %1064 = vmatprep.subr.mxu0 0.0
        %1065 = vmatpush1.msra.mxu0 0.0
        %1066 = vmatprep.subr.mxu0 0.0
        %1067 = vmatpush1.msra.mxu0 0.0
        %1068 = vmatprep.subr.mxu0 0.0
        %1069 = vmatpush1.msra.mxu0 0.0
        %1070 = vmatprep.subr.mxu0 0.0
        %1071 = vmatpush1.msra.mxu0 0.0
        %1072 = vmatprep.subr.mxu0 0.0
        %1073 = vmatpush1.msra.mxu0 0.0
        %1074 = vmatprep.subr.mxu0 0.0
        %1075 = vmatpush1.msra.mxu0 0.0
        %1076 = vmatprep.subr.mxu0 0.0
        %1077 = vmatpush1.msra.mxu0 0.0
        %1078 = vmatprep.subr.mxu0 %v1024
        %1079 = vmatpush1.msra.mxu0 %v1022
        %1080 = vmatprep.subr.mxu0 %v1018
        %1081 = vmatpush1.msra.mxu0 %v1016
        %1082 = vmatprep.subr.mxu0 0.0
        %1083 = vmatpush2.msra.mxu0 0.0
        %1084 = vmatprep.subr.mxu0 0.0
        %1085 = vmatpush2.msra.mxu0 0.0
        %1086 = vmatprep.subr.mxu0 0.0
        %1087 = vmatpush2.msra.mxu0 0.0
        %1088 = vmatprep.subr.mxu0 0.0
        %1089 = vmatpush2.msra.mxu0 0.0
        %1090 = vmatprep.subr.mxu0 0.0
        %1091 = vmatpush2.msra.mxu0 0.0
        %1092 = vmatprep.subr.mxu0 0.0
        %1093 = vmatpush2.msra.mxu0 0.0
        %1094 = vmatprep.subr.mxu0 0.0
        %1095 = vmatpush2.msra.mxu0 0.0
        %1096 = vmatprep.subr.mxu0 0.0
        %1097 = vmatpush2.msra.mxu0 0.0
        %1098 = vmatprep.subr.mxu0 0.0
        %1099 = vmatpush2.msra.mxu0 0.0
        %1100 = vmatprep.subr.mxu0 0.0
        %1101 = vmatpush2.msra.mxu0 0.0
        %1102 = vmatprep.subr.mxu0 0.0
        %1103 = vmatpush2.msra.mxu0 0.0
        %1104 = vmatprep.subr.mxu0 0.0
        %1105 = vmatpush2.msra.mxu0 0.0
        %1106 = vmatprep.subr.mxu0 0.0
        %1107 = vmatpush2.msra.mxu0 0.0
        %1108 = vmatprep.subr.mxu0 0.0
        %1109 = vmatpush2.msra.mxu0 0.0
        %1110 = vmatprep.subr.mxu0 0.0
        %1111 = vmatpush2.msra.mxu0 0.0
        %1112 = vmatprep.subr.mxu0 0.0
        %1113 = vmatpush2.msra.mxu0 0.0
        %1114 = vmatprep.mubr.f32.mxu0 0.0
        %1115 = vmatmul.mubr.f32.gmra.mxu0 %v1045
        %v1116 = vpop.f32.mrf.mxu0
        %v1117 = vadd.f32 %v1040, %v1116
        %v1118 = vpop.f32.mrf.mxu0
        %v1119 = vadd.f32 %v1041, %v1118
        %1120 = vmatprep.mubr.f32.mxu0 0.0
        %1121 = vmatmul.mubr.f32.gmra.mxu0 %v1048
        %v1122 = vpop.f32.mrf.mxu0
        %v1123 = vadd.f32 %v1042, %v1122
        %v1124 = vpop.f32.mrf.mxu0
        %v1125 = vadd.f32 %v1043, %v1124
        %1126 = vdwg.mxu0
        // Predicated region
        $region57: #{tpu_custom_call.1} parent=35 // pred_check
          %p1127 = pneg %p303
        $region58: #{tpu_custom_call.1} parent=35 // pred_check_branch
          %1129 = sbr.rel (%p1127) target = $region60
        $region59: #{tpu_custom_call.1} parent=35 // pred_region
          %v1130 = vmax.f32 %v1117, -1.0
          %v1131 = vmax.f32 %v1119, -1.0
          %v1132 = vmax.f32 %v1123, -1.0
          %v1133 = vmax.f32 %v1125, -1.0
          %v1134 = vmin.f32 %v1130, 1.0
          %v1135 = vmin.f32 %v1131, 1.0
          %v1136 = vmin.f32 %v1132, 1.0
          %v1137 = vmin.f32 %v1133, 1.0
          %1138 = vst [vmem:[%s298] sm:$0xff] %v1134
          %1139 = vst [vmem:[%s298 + $0x8] sm:$0xff] %v1135
          %1140 = vst [vmem:[%s298 + $0x10] sm:$0xff] %v1136
          %1141 = vst [vmem:[%s298 + $0x18] sm:$0xff] %v1137
        $region60: #{tpu_custom_call.1} parent=35 // pred_fallthru
          _
        %p1142 = scmp.lt.s32.totalorder %s28, 0
        // Predicated region
        $region61: #{tpu_custom_call.1} parent=35 // pred_check
          %p1143 = pneg %p1142
        $region62: #{tpu_custom_call.1} parent=35 // pred_check_branch
          %1145 = sbr.rel (%p1143) target = $region64
        $region63: #{tpu_custom_call.1} parent=35 // pred_region
          %1146 = vst [vmem:[%s298] sm:$0xff] %v1117
          %1147 = vst [vmem:[%s298 + $0x8] sm:$0xff] %v1119
          %1148 = vst [vmem:[%s298 + $0x10] sm:$0xff] %v1123
          %1149 = vst [vmem:[%s298 + $0x18] sm:$0xff] %v1125
        $region64: #{tpu_custom_call.1} parent=35 // pred_fallthru
          _
        %s1150 = sand.u32 %s139, 1
        %s1151 = scalar_lea.sflag [#allocation4], %s1150
        %s1152 = sand.u32 %s139, 1
        %s1153 = smul.addr %s1152, 32
        %s1154 = scalar_lea.vmem [#allocation10], %s1153
        // Predicated region
        $region65: #{tpu_custom_call.1} parent=35 // pred_check
          %p1155 = pneg %p149
        $region66: #{tpu_custom_call.1} parent=35 // pred_check_branch
          %1157 = sbr.rel (%p1155) target = $region68
        $region67: #{tpu_custom_call.1} parent=35 // pred_region
          %s1158 = smul.u32 2, %s27
          %s1160 = ssub.s32 512, 512
          %1161 = vsyncadd %s1151, %s1160
          %s1162 = smul.addr %s1158, 128
          %s1163 = scalar_lea.hbm %s4, %s1162
          %s1164 = sshll.u32 %s1154, 4
          %s1165 = int_to_ptr.vmem [resolvable:$true] %s1164
          %1170 = dma.vmem_to_hbm [thread:$0]  %s1165, 512, %s1163, %s1151, 256, 512, 16
        $region68: #{tpu_custom_call.1} parent=35 // pred_fallthru
          _
      $region36: #{tpu_custom_call.1} parent=5 // pred_fallthru
        _
      %p1171 = scmp.le.s32.totalorder 2, %s18
      // Predicated region
      $region69: #{tpu_custom_call.1} parent=5 // pred_check
        %p1172 = pneg %p1171
      $region70: #{tpu_custom_call.1} parent=5 // pred_check_branch
        %1174 = sbr.rel (%p1172) target = $region72
      $region71: #{tpu_custom_call.1} parent=5 // pred_region
        %s1175 = ssub.s32 %s18, 2
        // Predicated region
        $region73: #{tpu_custom_call.1} parent=71 // pred_check
          %p1176 = pneg %p155
        $region74: #{tpu_custom_call.1} parent=71 // pred_check_branch
          %1178 = sbr.rel (%p1176) target = $region76
        $region75: #{tpu_custom_call.1} parent=71 // pred_region
          %s1179 = sand.u32 %s140, 1
          %s1180 = scalar_lea.sflag [#allocation4], %s1179
          %s1181 = sand.u32 %s140, 1
          %s1182 = smul.addr %s1181, 32
          %s1183 = scalar_lea.vmem [#allocation10], %s1182
          %1184 = dma.done %s1180, 512
        $region76: #{tpu_custom_call.1} parent=71 // pred_fallthru
          _
      $region72: #{tpu_custom_call.1} parent=5 // pred_fallthru
        _
    $region6: #{tpu_custom_call.1} parent=1 // loop_footer
      %s22 = sadd.s32 1, %s18
    $region7: #{tpu_custom_call.1} parent=1 // loop_footer_branch
      %17 = sbr.rel target = $region3
    $region8: #{tpu_custom_call.1} parent=1 // loop_exit
      _
    %1185 = vsyncpa [#allocation3], 1
    %s1186 = scalar_lea.sflag [#allocation3], 1
    %1187 = vsyncpa %s1186, 1
    %1188 = vsyncpa [#allocation7], 1
    %1189 = vsyncpa [#allocation4], 1
    %s1190 = scalar_lea.sflag [#allocation4], 1
    %1191 = vsyncpa %s1190, 1
    %1192 = vsyncpa [#allocation5], 1
    %s1193 = scalar_lea.sflag [#allocation5], 1
    %1194 = vsyncpa %s1193, 1

</llo_original>
